<compile_context>
chip_gen: v7x
topology: tpu7x:2x2x1
jax: 0.10.0
libtpu: 0.0.40
codegen_flags: <defaults>
</compile_context>

<pallas_src>
import jax
import jax.numpy as jnp
from jax.experimental import pallas as pl
from jax.experimental.pallas import tpu as pltpu

OUT_W = 128          # lane-dense output slab width (logits + value + zero padding)
F = 256              # fused (actor|critic) feature width


def _round_up(x, m):
    return ((x + m - 1) // m) * m


# -------------------------- Pallas kernel ------------------------------------
def havac_fused_kernel(idx_ref, obs_ref, mask_ref, w0_ref, wr_ref, b_ref, out_ref):
    """Fused actor+critic MLP stack: 6 block-diagonal (.,256)@(256,256) matmuls.

    Column layout of the fused activations:
      L0/L1 : actor cols [0:128),  critic cols [128:256)
      L2/L3 : actor cols [0:64),   critic cols [64:128)
      L4    : actor hidden cols [0:64) (ReLU), critic value col 64 (linear)
      L5    : actor logits cols [0:A), value passthrough col A (identity weight)
    """
    del idx_ref  # agent selection is folded into the weight index_maps

    # fused layer 0 (actor enc0 | critic enc0) + ReLU
    h = jnp.dot(obs_ref[...].astype(jnp.bfloat16), w0_ref[...],
                preferred_element_type=jnp.float32) + b_ref[0:1, :]
    h = jnp.maximum(h, 0.0)

    # fused layers 1..5 (statically unrolled)
    for l in range(1, 6):
        w = wr_ref[(l - 1) * F:l * F, :]
        h = jnp.dot(h.astype(jnp.bfloat16), w,
                    preferred_element_type=jnp.float32) + b_ref[l:l + 1, :]
        if l <= 3:
            h = jnp.maximum(h, 0.0)
        elif l == 4:
            # ReLU only on the actor hidden columns; critic value (col 64) is linear.
            col = jax.lax.broadcasted_iota(jnp.int32, h.shape, 1)
            h = jnp.where(col < 64, jnp.maximum(h, 0.0), h)
        # l == 5: no activation (logits + value passthrough)

    y = h[:, :OUT_W]  # lane-aligned slice (128 of 256)
    # discrete action masking: logit[action_mask == 0] = -99999999
    # (mask is padded with 1s for col >= A, so the value column passes through)
    out_ref[...] = jnp.where(mask_ref[...] == 0, jnp.float32(-99999999.0), y)


# -------------------------- parameter setup ----------------------------------
def _pack_agent_params(p, agent_obs, global_obs, action_shape, d0):
    """Pack one agent's 11 PyTorch-style Linear layers into fused block-diagonal slabs."""
    A = action_shape
    w0 = jnp.zeros((d0, F), jnp.float32)
    w0 = w0.at[0:agent_obs, 0:128].set(p['ae0_w'])
    w0 = w0.at[agent_obs:agent_obs + global_obs, 128:256].set(p['ce0_w'])

    b = jnp.zeros((8, F), jnp.float32)
    b = b.at[0, 0:128].set(p['ae0_b']).at[0, 128:256].set(p['ce0_b'])

    wr = jnp.zeros((5, F, F), jnp.float32)
    # fused layer 1: enc layer 1 (128->128) | (128->128)
    wr = wr.at[0, 0:128, 0:128].set(p['ae1_w'])
    wr = wr.at[0, 128:256, 128:256].set(p['ce1_w'])
    b = b.at[1, 0:128].set(p['ae1_b']).at[1, 128:256].set(p['ce1_b'])
    # fused layer 2: enc layer 2 (128->64) | (128->64)
    wr = wr.at[1, 0:128, 0:64].set(p['ae2_w'])
    wr = wr.at[1, 128:256, 64:128].set(p['ce2_w'])
    b = b.at[2, 0:64].set(p['ae2_b']).at[2, 64:128].set(p['ce2_b'])
    # fused layer 3: actor head MLP0 (64->64) | critic head MLP0 (64->64)
    wr = wr.at[2, 0:64, 0:64].set(p['ah0_w'])
    wr = wr.at[2, 64:128, 64:128].set(p['ch0_w'])
    b = b.at[3, 0:64].set(p['ah0_b']).at[3, 64:128].set(p['ch0_b'])
    # fused layer 4: actor head MLP1 (64->64, ReLU) | critic final (64->1, linear -> col 64)
    wr = wr.at[3, 0:64, 0:64].set(p['ah1_w'])
    wr = wr.at[3, 64:128, 64:65].set(p['ch1_w'])
    b = b.at[4, 0:64].set(p['ah1_b']).at[4, 64].set(p['ch1_b'][0])
    # fused layer 5: actor logits (64->A) + identity passthrough of the value into col A
    wr = wr.at[4, 0:64, 0:A].set(p['ah2_w'])
    wr = wr.at[4, 64, A].set(1.0)
    b = b.at[5, 0:A].set(p['ah2_b'])

    return (w0.astype(jnp.bfloat16),
            wr.reshape(5 * F, F).astype(jnp.bfloat16),
            b)


def init_havac_params(key, agent_num, agent_obs, global_obs, action_shape):
    """Deterministic per-agent parameter stacks (PyTorch-Linear-style uniform init),
    returned pre-packed into fused bf16 weight slabs + f32 bias slab per agent."""
    H0, H1, H2, AH, CH = 128, 128, 64, 64, 64
    A = action_shape
    d0 = _round_up(agent_obs + global_obs, 128)

    layer_dims = {
        'ae0': (agent_obs, H0), 'ae1': (H0, H1), 'ae2': (H1, H2),
        'ah0': (H2, AH), 'ah1': (AH, AH), 'ah2': (AH, A),
        'ce0': (global_obs, H0), 'ce1': (H0, H1), 'ce2': (H1, H2),
        'ch0': (H2, CH), 'ch1': (CH, 1),
    }
    w0s, wrs, bs = [], [], []
    for _ in range(agent_num):
        p = {}
        for name, (fin, fout) in layer_dims.items():
            key, kw, kb = jax.random.split(key, 3)
            bound = 1.0 / (fin ** 0.5)
            p[name + '_w'] = jax.random.uniform(kw, (fin, fout), jnp.float32, -bound, bound)
            p[name + '_b'] = jax.random.uniform(kb, (fout,), jnp.float32, -bound, bound)
        w0, wr, b = _pack_agent_params(p, agent_obs, global_obs, A, d0)
        w0s.append(w0); wrs.append(wr); bs.append(b)
    return (jnp.stack(w0s), jnp.stack(wrs), jnp.stack(bs))


# -------------------------- wrapper (HAVAC.forward) ---------------------------
def havac_forward(agent_idx, params, inputs, mode="compute_actor_critic"):
    assert mode in ("compute_actor", "compute_critic", "compute_actor_critic")
    w0_all, wr_all, b_all = params

    agent_state = inputs["obs"]["agent_state"].astype(jnp.float32)
    global_state = inputs["obs"]["global_state"].astype(jnp.float32)
    action_mask = inputs["obs"]["action_mask"].astype(jnp.int32)

    B = agent_state.shape[0]
    Na = agent_state.shape[1]
    Ng = global_state.shape[1]
    A = action_mask.shape[-1]
    d0 = w0_all.shape[1]
    assert A + 1 <= OUT_W, "action_shape must be < 128"  # TODO(synk): wider action spaces

    # batch tiling: big tiles amortize per-step overhead; bounded VMEM independent of B
    TB = min(512, _round_up(B, 8))
    Bp = _round_up(B, TB)
    nb = Bp // TB

    # concatenated + padded observation slab (actor obs | critic obs | zeros)
    obs_cat = jnp.zeros((Bp, d0), jnp.float32)
    obs_cat = obs_cat.at[:B, :Na].set(agent_state)
    obs_cat = obs_cat.at[:B, Na:Na + Ng].set(global_state)

    # lane-dense int32 mask slab; padding columns (>= A) are 1 so value/padding pass through
    mask_pad = jnp.ones((Bp, OUT_W), jnp.int32).at[:B, :A].set(action_mask)

    idx = jnp.asarray([agent_idx], dtype=jnp.int32)

    out = pl.pallas_call(
        havac_fused_kernel,
        out_shape=jax.ShapeDtypeStruct((Bp, OUT_W), jnp.float32),
        grid_spec=pltpu.PrefetchScalarGridSpec(
            num_scalar_prefetch=1,
            grid=(nb,),
            in_specs=[
                # activations: tiled over the batch
                pl.BlockSpec((TB, d0), lambda i, idx_ref: (i, 0)),
                pl.BlockSpec((TB, OUT_W), lambda i, idx_ref: (i, 0)),
                # weights/biases: per-agent block selected via scalar prefetch,
                # constant across the batch grid -> stay resident in VMEM
                pl.BlockSpec((None, d0, F), lambda i, idx_ref: (idx_ref[0], 0, 0)),
                pl.BlockSpec((None, 5 * F, F), lambda i, idx_ref: (idx_ref[0], 0, 0)),
                pl.BlockSpec((None, 8, F), lambda i, idx_ref: (idx_ref[0], 0, 0)),
            ],
            out_specs=pl.BlockSpec((TB, OUT_W), lambda i, idx_ref: (i, 0)),
        ),
        compiler_params=pltpu.CompilerParams(
            dimension_semantics=("parallel",),
        ),
    )(idx, obs_cat, mask_pad, w0_all, wr_all, b_all)

    out = out[:B]
    logit = out[:, :A]
    value = out[:, A]  # RegressionHead squeezes the trailing singleton -> (B,)

    if mode == "compute_actor":
        return {"logit": logit}
    if mode == "compute_critic":
        return {"value": value}
    return {"logit": logit, "value": value}


# -------------------------- demo ---------------------------------------------
if __name__ == "__main__":
    B = 8                 # batch
    AGENT_OBS = 16        # per-agent obs dim
    GLOBAL_OBS = 32       # global obs dim
    ACTION = 8            # discrete action dim
    AGENT_NUM = 2

    key = jax.random.PRNGKey(0)
    k_par, k_a, k_g, k_m = jax.random.split(key, 4)

    params = init_havac_params(k_par, AGENT_NUM, AGENT_OBS, GLOBAL_OBS, ACTION)

    inputs = {
        "obs": {
            "agent_state": jax.random.normal(k_a, (B, AGENT_OBS), jnp.float32),
            "global_state": jax.random.normal(k_g, (B, GLOBAL_OBS), jnp.float32),
            "action_mask": jax.random.randint(k_m, (B, ACTION), 0, 2, jnp.int32),
        },
    }

    out = havac_forward(agent_idx=1, params=params, inputs=inputs,
                        mode="compute_actor_critic")
    jax.block_until_ready(out)

    assert out["logit"].shape == (B, ACTION)
    assert out["value"].shape == (B,)
    print("KERNEL_OK")
</pallas_src>

<mosaic_0001>
module attributes {stable_mosaic.version = 11 : i64} {
  func.func @havac_fused_kernel(%arg0: i32, %arg1: memref<1xi32, #tpu.memory_space<smem>>, %arg2: memref<8x128xf32, #tpu.memory_space<vmem>>, %arg3: memref<8x128xi32, #tpu.memory_space<vmem>>, %arg4: memref<1x128x256xbf16, #tpu.memory_space<vmem>>, %arg5: memref<1x1280x256xbf16, #tpu.memory_space<vmem>>, %arg6: memref<1x8x256xf32, #tpu.memory_space<vmem>>, %arg7: memref<8x128xf32, #tpu.memory_space<vmem>>) attributes {dimension_semantics = [#tpu.dimension_semantics<parallel>], iteration_bounds = array<i64: 1>, scalar_prefetch = 1 : i64, scratch_operands = 0 : i64, tpu.core_type = #tpu.core_type<tc>, window_params = [{transform_indices = @transform_0, window_bounds = array<i64: 8, 128>}, {transform_indices = @transform_1, window_bounds = array<i64: 8, 128>}, {transform_indices = @transform_2, window_bounds = array<i64: 1, 128, 256>}, {transform_indices = @transform_3, window_bounds = array<i64: 1, 1280, 256>}, {transform_indices = @transform_4, window_bounds = array<i64: 1, 8, 256>}, {transform_indices = @transform_5, window_bounds = array<i64: 8, 128>}]} {
    %c0 = arith.constant 0 : index
    %c0_0 = arith.constant 0 : index
    %0 = vector.load %arg2[%c0, %c0_0] : memref<8x128xf32, #tpu.memory_space<vmem>>, vector<8x128xf32>
    %1 = arith.truncf %0 : vector<8x128xf32> to vector<8x128xbf16>
    %c0_1 = arith.constant 0 : index
    %c0_2 = arith.constant 0 : index
    %c0_3 = arith.constant 0 : index
    %2 = vector.load %arg4[%c0_1, %c0_2, %c0_3] : memref<1x128x256xbf16, #tpu.memory_space<vmem>>, vector<1x128x256xbf16>
    %3 = vector.shape_cast %2 : vector<1x128x256xbf16> to vector<128x256xbf16>
    %cst = arith.constant dense<0.000000e+00> : vector<8x256xf32>
    %4 = tpu.matmul %1, %3, %cst {dimension_numbers = #tpu.dot_dimension_numbers<[1], [0], [0], [1], [0, 0, 1, 1], [], []>} : vector<8x128xbf16>, vector<128x256xbf16>, vector<8x256xf32> -> vector<8x256xf32>
    %c0_4 = arith.constant 0 : index
    %c0_5 = arith.constant 0 : index
    %c0_6 = arith.constant 0 : index
    %5 = vector.load %arg6[%c0_4, %c0_5, %c0_6] : memref<1x8x256xf32, #tpu.memory_space<vmem>>, vector<1x1x256xf32>
    %6 = vector.shape_cast %5 : vector<1x1x256xf32> to vector<1x256xf32>
    %7 = vector.broadcast %6 : vector<1x256xf32> to vector<8x256xf32>
    %8 = arith.addf %4, %7 : vector<8x256xf32>
    %cst_7 = arith.constant 0.000000e+00 : f32
    %9 = vector.broadcast %cst_7 : f32 to vector<8x256xf32>
    %10 = arith.maximumf %8, %9 : vector<8x256xf32>
    %c0_8 = arith.constant 0 : index
    %c0_9 = arith.constant 0 : index
    %c0_10 = arith.constant 0 : index
    %11 = vector.load %arg5[%c0_8, %c0_9, %c0_10] : memref<1x1280x256xbf16, #tpu.memory_space<vmem>>, vector<1x256x256xbf16>
    %12 = vector.shape_cast %11 : vector<1x256x256xbf16> to vector<256x256xbf16>
    %13 = arith.truncf %10 : vector<8x256xf32> to vector<8x256xbf16>
    %cst_11 = arith.constant dense<0.000000e+00> : vector<8x256xf32>
    %14 = tpu.matmul %13, %12, %cst_11 {dimension_numbers = #tpu.dot_dimension_numbers<[1], [0], [0], [1], [0, 0, 1, 1], [], []>} : vector<8x256xbf16>, vector<256x256xbf16>, vector<8x256xf32> -> vector<8x256xf32>
    %c0_12 = arith.constant 0 : index
    %c1 = arith.constant 1 : index
    %c0_13 = arith.constant 0 : index
    %15 = vector.load %arg6[%c0_12, %c1, %c0_13] : memref<1x8x256xf32, #tpu.memory_space<vmem>>, vector<1x1x256xf32>
    %16 = vector.shape_cast %15 : vector<1x1x256xf32> to vector<1x256xf32>
    %17 = vector.broadcast %16 : vector<1x256xf32> to vector<8x256xf32>
    %18 = arith.addf %14, %17 : vector<8x256xf32>
    %cst_14 = arith.constant 0.000000e+00 : f32
    %19 = vector.broadcast %cst_14 : f32 to vector<8x256xf32>
    %20 = arith.maximumf %18, %19 : vector<8x256xf32>
    %c0_15 = arith.constant 0 : index
    %c256 = arith.constant 256 : index
    %c0_16 = arith.constant 0 : index
    %21 = vector.load %arg5[%c0_15, %c256, %c0_16] : memref<1x1280x256xbf16, #tpu.memory_space<vmem>>, vector<1x256x256xbf16>
    %22 = vector.shape_cast %21 : vector<1x256x256xbf16> to vector<256x256xbf16>
    %23 = arith.truncf %20 : vector<8x256xf32> to vector<8x256xbf16>
    %cst_17 = arith.constant dense<0.000000e+00> : vector<8x256xf32>
    %24 = tpu.matmul %23, %22, %cst_17 {dimension_numbers = #tpu.dot_dimension_numbers<[1], [0], [0], [1], [0, 0, 1, 1], [], []>} : vector<8x256xbf16>, vector<256x256xbf16>, vector<8x256xf32> -> vector<8x256xf32>
    %c0_18 = arith.constant 0 : index
    %c2 = arith.constant 2 : index
    %c0_19 = arith.constant 0 : index
    %25 = vector.load %arg6[%c0_18, %c2, %c0_19] : memref<1x8x256xf32, #tpu.memory_space<vmem>>, vector<1x1x256xf32>
    %26 = vector.shape_cast %25 : vector<1x1x256xf32> to vector<1x256xf32>
    %27 = vector.broadcast %26 : vector<1x256xf32> to vector<8x256xf32>
    %28 = arith.addf %24, %27 : vector<8x256xf32>
    %cst_20 = arith.constant 0.000000e+00 : f32
    %29 = vector.broadcast %cst_20 : f32 to vector<8x256xf32>
    %30 = arith.maximumf %28, %29 : vector<8x256xf32>
    %c0_21 = arith.constant 0 : index
    %c512 = arith.constant 512 : index
    %c0_22 = arith.constant 0 : index
    %31 = vector.load %arg5[%c0_21, %c512, %c0_22] : memref<1x1280x256xbf16, #tpu.memory_space<vmem>>, vector<1x256x256xbf16>
    %32 = vector.shape_cast %31 : vector<1x256x256xbf16> to vector<256x256xbf16>
    %33 = arith.truncf %30 : vector<8x256xf32> to vector<8x256xbf16>
    %cst_23 = arith.constant dense<0.000000e+00> : vector<8x256xf32>
    %34 = tpu.matmul %33, %32, %cst_23 {dimension_numbers = #tpu.dot_dimension_numbers<[1], [0], [0], [1], [0, 0, 1, 1], [], []>} : vector<8x256xbf16>, vector<256x256xbf16>, vector<8x256xf32> -> vector<8x256xf32>
    %c0_24 = arith.constant 0 : index
    %c3 = arith.constant 3 : index
    %c0_25 = arith.constant 0 : index
    %35 = vector.load %arg6[%c0_24, %c3, %c0_25] : memref<1x8x256xf32, #tpu.memory_space<vmem>>, vector<1x1x256xf32>
    %36 = vector.shape_cast %35 : vector<1x1x256xf32> to vector<1x256xf32>
    %37 = vector.broadcast %36 : vector<1x256xf32> to vector<8x256xf32>
    %38 = arith.addf %34, %37 : vector<8x256xf32>
    %cst_26 = arith.constant 0.000000e+00 : f32
    %39 = vector.broadcast %cst_26 : f32 to vector<8x256xf32>
    %40 = arith.maximumf %38, %39 : vector<8x256xf32>
    %c0_27 = arith.constant 0 : index
    %c768 = arith.constant 768 : index
    %c0_28 = arith.constant 0 : index
    %41 = vector.load %arg5[%c0_27, %c768, %c0_28] : memref<1x1280x256xbf16, #tpu.memory_space<vmem>>, vector<1x256x256xbf16>
    %42 = vector.shape_cast %41 : vector<1x256x256xbf16> to vector<256x256xbf16>
    %43 = arith.truncf %40 : vector<8x256xf32> to vector<8x256xbf16>
    %cst_29 = arith.constant dense<0.000000e+00> : vector<8x256xf32>
    %44 = tpu.matmul %43, %42, %cst_29 {dimension_numbers = #tpu.dot_dimension_numbers<[1], [0], [0], [1], [0, 0, 1, 1], [], []>} : vector<8x256xbf16>, vector<256x256xbf16>, vector<8x256xf32> -> vector<8x256xf32>
    %c0_30 = arith.constant 0 : index
    %c4 = arith.constant 4 : index
    %c0_31 = arith.constant 0 : index
    %45 = vector.load %arg6[%c0_30, %c4, %c0_31] : memref<1x8x256xf32, #tpu.memory_space<vmem>>, vector<1x1x256xf32>
    %46 = vector.shape_cast %45 : vector<1x1x256xf32> to vector<1x256xf32>
    %47 = vector.broadcast %46 : vector<1x256xf32> to vector<8x256xf32>
    %48 = arith.addf %44, %47 : vector<8x256xf32>
    %49 = tpu.iota {dimensions = array<i32: 1>} : vector<8x256xi32>
    %c64_i32 = arith.constant 64 : i32
    %50 = vector.broadcast %c64_i32 : i32 to vector<8x256xi32>
    %51 = arith.cmpi slt, %49, %50 : vector<8x256xi32>
    %cst_32 = arith.constant 0.000000e+00 : f32
    %52 = vector.broadcast %cst_32 : f32 to vector<8x256xf32>
    %53 = arith.maximumf %48, %52 : vector<8x256xf32>
    %54 = arith.select %51, %53, %48 : vector<8x256xi1>, vector<8x256xf32>
    %c0_33 = arith.constant 0 : index
    %c1024 = arith.constant 1024 : index
    %c0_34 = arith.constant 0 : index
    %55 = vector.load %arg5[%c0_33, %c1024, %c0_34] : memref<1x1280x256xbf16, #tpu.memory_space<vmem>>, vector<1x256x256xbf16>
    %56 = vector.shape_cast %55 : vector<1x256x256xbf16> to vector<256x256xbf16>
    %57 = arith.truncf %54 : vector<8x256xf32> to vector<8x256xbf16>
    %cst_35 = arith.constant dense<0.000000e+00> : vector<8x256xf32>
    %58 = tpu.matmul %57, %56, %cst_35 {dimension_numbers = #tpu.dot_dimension_numbers<[1], [0], [0], [1], [0, 0, 1, 1], [], []>} : vector<8x256xbf16>, vector<256x256xbf16>, vector<8x256xf32> -> vector<8x256xf32>
    %c0_36 = arith.constant 0 : index
    %c5 = arith.constant 5 : index
    %c0_37 = arith.constant 0 : index
    %59 = vector.load %arg6[%c0_36, %c5, %c0_37] : memref<1x8x256xf32, #tpu.memory_space<vmem>>, vector<1x1x256xf32>
    %60 = vector.shape_cast %59 : vector<1x1x256xf32> to vector<1x256xf32>
    %61 = vector.broadcast %60 : vector<1x256xf32> to vector<8x256xf32>
    %62 = arith.addf %58, %61 : vector<8x256xf32>
    %63 = vector.extract_strided_slice %62 {offsets = [0, 0], sizes = [8, 128], strides = [1, 1]} : vector<8x256xf32> to vector<8x128xf32>
    %c0_38 = arith.constant 0 : index
    %c0_39 = arith.constant 0 : index
    %64 = vector.load %arg3[%c0_38, %c0_39] : memref<8x128xi32, #tpu.memory_space<vmem>>, vector<8x128xi32>
    %c0_i32 = arith.constant 0 : i32
    %65 = vector.broadcast %c0_i32 : i32 to vector<8x128xi32>
    %66 = arith.cmpi eq, %64, %65 : vector<8x128xi32>
    %cst_40 = arith.constant -1.000000e+08 : f32
    %67 = vector.broadcast %cst_40 : f32 to vector<8x128xf32>
    %68 = arith.select %66, %67, %63 : vector<8x128xi1>, vector<8x128xf32>
    %c0_41 = arith.constant 0 : index
    %c0_42 = arith.constant 0 : index
    %69 = vector.load %arg7[%c0_41, %c0_42] : memref<8x128xf32, #tpu.memory_space<vmem>>, vector<8x128xf32>
    tpu.vector_store %arg7[%c0_41, %c0_42], %68 {strides = array<i32>} : memref<8x128xf32, #tpu.memory_space<vmem>>, vector<8x128xf32>,
    return
  }
  func.func @transform_0(%arg0: i32, %arg1: memref<1xi32, #tpu.memory_space<smem>>) -> (i32, i32) {
    %c0_i32 = arith.constant 0 : i32
    %c0_i32_0 = arith.constant 0 : i32
    return %arg0, %c0_i32 : i32, i32
  }
  func.func @transform_1(%arg0: i32, %arg1: memref<1xi32, #tpu.memory_space<smem>>) -> (i32, i32) {
    %c0_i32 = arith.constant 0 : i32
    %c0_i32_0 = arith.constant 0 : i32
    return %arg0, %c0_i32 : i32, i32
  }
  func.func @transform_2(%arg0: i32, %arg1: memref<1xi32, #tpu.memory_space<smem>>) -> (i32, i32, i32) {
    %c0 = arith.constant 0 : index
    %0 = memref.load %arg1[%c0] : memref<1xi32, #tpu.memory_space<smem>>
    %c0_i32 = arith.constant 0 : i32
    %c0_i32_0 = arith.constant 0 : i32
    %c0_i32_1 = arith.constant 0 : i32
    return %0, %c0_i32, %c0_i32_0 : i32, i32, i32
  }
  func.func @transform_3(%arg0: i32, %arg1: memref<1xi32, #tpu.memory_space<smem>>) -> (i32, i32, i32) {
    %c0 = arith.constant 0 : index
    %0 = memref.load %arg1[%c0] : memref<1xi32, #tpu.memory_space<smem>>
    %c0_i32 = arith.constant 0 : i32
    %c0_i32_0 = arith.constant 0 : i32
    %c0_i32_1 = arith.constant 0 : i32
    return %0, %c0_i32, %c0_i32_0 : i32, i32, i32
  }
  func.func @transform_4(%arg0: i32, %arg1: memref<1xi32, #tpu.memory_space<smem>>) -> (i32, i32, i32) {
    %c0 = arith.constant 0 : index
    %0 = memref.load %arg1[%c0] : memref<1xi32, #tpu.memory_space<smem>>
    %c0_i32 = arith.constant 0 : i32
    %c0_i32_0 = arith.constant 0 : i32
    %c0_i32_1 = arith.constant 0 : i32
    return %0, %c0_i32, %c0_i32_0 : i32, i32, i32
  }
  func.func @transform_5(%arg0: i32, %arg1: memref<1xi32, #tpu.memory_space<smem>>) -> (i32, i32) {
    %c0_i32 = arith.constant 0 : i32
    %c0_i32_0 = arith.constant 0 : i32
    return %arg0, %c0_i32 : i32, i32
  }
}

</mosaic_0001>

<llo_original>
// kernel: tpu_custom_call.1
$region0: #{tpu_custom_call.1}
  #allocation0 [shape = 'u32[]', space=smem, size = 0x4, offset = 0x4, fixed_abs, tag = 'smem constant byte address 0x4 - core index']
  #allocation1 [shape = 'u32[144,128]{1,0:T(1,128)}', space=vmem, size = 0x12000, scoped, tag = 'internal scratch']
  #allocation2 [shape = 's32[1]{0}', space=sflag, size = 0x4, scoped, tag = 'scoped memory for tpu_custom_call.1']
  #allocation3 [shape = 's32[1]{0:T(128)S(6)}', space=smem, size = 0x200, scoped, tag = 'prefetched SMEM operand 0']
  %s0 = inlined_call_operand.<no memory space> [shape: s32[1], index: 0, kind: input, shape index: {}]
  %s1 = inlined_call_operand.hbm [shape: f32[8,128], index: 1, kind: input, shape index: {}]
  %s2 = inlined_call_operand.hbm [shape: s32[8,128], index: 2, kind: input, shape index: {}]
  %s3 = inlined_call_operand.hbm [shape: bf16[2,128,256], index: 3, kind: input, shape index: {}]
  %s4 = inlined_call_operand.hbm [shape: bf16[2,1280,256], index: 4, kind: input, shape index: {}]
  %s5 = inlined_call_operand.hbm [shape: f32[2,8,256], index: 5, kind: input, shape index: {}]
  %s6 = inlined_call_operand.hbm [shape: f32[8,128], index: 6, kind: output, shape index: {}]
  %s7 = sld [smem:[#allocation0]]
  $region50: #{tpu_custom_call.1} parent=0
    _
  %s9 = ssub.s32 1, %s7
  %s10 = scalar_select 0, %s9, %s7
  %11 = sst [smem:[#allocation3]] %s0
  $region1: #{tpu_custom_call.1} parent=0
    #allocation4 [shape = 'u8[4096]{0}', space=vmem, size = 0x1000, scoped, tag = 'input window, operand 1, single buffered']
    #allocation5 [shape = 's32[1]{0}', space=sflag, size = 0x4, scoped, tag = 'scoped memory for tpu_custom_call.1']
    #allocation6 [shape = 's32[1]{0}', space=sflag, size = 0x4, scoped, tag = 'scoped memory for tpu_custom_call.1']
    #allocation7 [shape = 'u8[4096]{0}', space=vmem, size = 0x1000, scoped, tag = 'input window, operand 2, single buffered']
    #allocation8 [shape = 's32[1]{0}', space=sflag, size = 0x4, scoped, tag = 'scoped memory for tpu_custom_call.1']
    #allocation9 [shape = 'u8[65536]{0}', space=vmem, size = 0x10000, scoped, tag = 'input window, operand 3, single buffered']
    #allocation10 [shape = 'u8[655360]{0}', space=vmem, size = 0xa0000, scoped, tag = 'input window, operand 4, single buffered']
    #allocation11 [shape = 's32[1]{0}', space=sflag, size = 0x4, scoped, tag = 'scoped memory for tpu_custom_call.1']
    #allocation12 [shape = 'u8[8192]{0}', space=vmem, size = 0x2000, scoped, tag = 'input window, operand 5, single buffered']
    #allocation13 [shape = 'u8[4096]{0}', space=vmem, size = 0x1000, scoped, tag = 'output window, operand 0, single buffered']
    %12 = vsyncpa [#allocation5], 0
    %13 = vsyncpa [#allocation8], 0
    %14 = vsyncpa [#allocation11], 0
    %15 = vsyncpa [#allocation6], 0
    // Predicated region
    $region2: #{tpu_custom_call.1} parent=1 // pred_check
      _
    $region3: #{tpu_custom_call.1} parent=1 // pred_check_branch
      %17 = sbr.rel (0) target = $region5
    $region4: #{tpu_custom_call.1} parent=1 // pred_region
      %s19 = ssub.s32 128, 128
      %20 = vsyncadd [#allocation5], %s19
      %s22 = sshll.u32 [#allocation4], 4
      %s23 = int_to_ptr.vmem [resolvable:$true] %s22
      %25 = dma.hbm_to_vmem [thread:$0]  %s1, 128, %s23, [#allocation5]
    $region5: #{tpu_custom_call.1} parent=1 // pred_fallthru
      _
    // Predicated region
    $region6: #{tpu_custom_call.1} parent=1 // pred_check
      _
    $region7: #{tpu_custom_call.1} parent=1 // pred_check_branch
      %27 = sbr.rel (0) target = $region9
    $region8: #{tpu_custom_call.1} parent=1 // pred_region
      %s29 = ssub.s32 128, 128
      %30 = vsyncadd [#allocation8], %s29
      %s32 = sshll.u32 [#allocation7], 4
      %s33 = int_to_ptr.vmem [resolvable:$true] %s32
      %35 = dma.hbm_to_vmem [thread:$0]  %s2, 128, %s33, [#allocation8]
    $region9: #{tpu_custom_call.1} parent=1 // pred_fallthru
      _
    // Predicated region
    $region10: #{tpu_custom_call.1} parent=1 // pred_check
      _
    $region11: #{tpu_custom_call.1} parent=1 // pred_check_branch
      %37 = sbr.rel (0) target = $region13
    $region12: #{tpu_custom_call.1} parent=1 // pred_region
      %s38 = sld [smem:[#allocation3]]
      %s40 = ssub.s32 2048, 2048
      %41 = vsyncadd [#allocation8], %s40
      %s42 = smul.addr %s38, 32
      %s43 = smul.addr %s42, 64
      %s44 = scalar_lea.hbm %s3, %s43
      %s45 = sshll.u32 [#allocation9], 4
      %s46 = int_to_ptr.vmem [resolvable:$true] %s45
      %51 = dma.hbm_to_vmem [thread:$0]  %s44, 2048, %s46, [#allocation8], 128, 128, 8
    $region13: #{tpu_custom_call.1} parent=1 // pred_fallthru
      _
    // Predicated region
    $region14: #{tpu_custom_call.1} parent=1 // pred_check
      _
    $region15: #{tpu_custom_call.1} parent=1 // pred_check_branch
      %53 = sbr.rel (0) target = $region17
    $region16: #{tpu_custom_call.1} parent=1 // pred_region
      %s54 = sld [smem:[#allocation3]]
      %s56 = ssub.s32 20480, 20480
      %57 = vsyncadd [#allocation11], %s56
      %s58 = smul.addr %s54, 320
      %s59 = smul.addr %s58, 64
      %s60 = scalar_lea.hbm %s4, %s59
      %s61 = sshll.u32 [#allocation10], 4
      %s62 = int_to_ptr.vmem [resolvable:$true] %s61
      %67 = dma.hbm_to_vmem [thread:$0]  %s60, 20480, %s62, [#allocation11], 128, 128, 8
    $region17: #{tpu_custom_call.1} parent=1 // pred_fallthru
      _
    // Predicated region
    $region18: #{tpu_custom_call.1} parent=1 // pred_check
      _
    $region19: #{tpu_custom_call.1} parent=1 // pred_check_branch
      %69 = sbr.rel (0) target = $region21
    $region20: #{tpu_custom_call.1} parent=1 // pred_region
      %s70 = sld [smem:[#allocation3]]
      %s72 = ssub.s32 256, 256
      %73 = vsyncadd [#allocation11], %s72
      %s74 = smul.addr %s70, 2
      %s75 = smul.addr %s74, 128
      %s76 = scalar_lea.hbm %s5, %s75
      %s78 = sshll.u32 [#allocation12], 4
      %s79 = int_to_ptr.vmem [resolvable:$true] %s78
      %81 = dma.hbm_to_vmem [thread:$0]  %s76, 256, %s79, [#allocation11]
    $region21: #{tpu_custom_call.1} parent=1 // pred_fallthru
      _
    // Predicated region
    $region22: #{tpu_custom_call.1} parent=1 // pred_check
      _
    $region23: #{tpu_custom_call.1} parent=1 // pred_check_branch
      %83 = sbr.rel (0) target = $region25
    $region24: #{tpu_custom_call.1} parent=1 // pred_region
      %84 = dma.done [#allocation5], 128
    $region25: #{tpu_custom_call.1} parent=1 // pred_fallthru
      _
    // Predicated region
    $region26: #{tpu_custom_call.1} parent=1 // pred_check
      _
    $region27: #{tpu_custom_call.1} parent=1 // pred_check_branch
      %86 = sbr.rel (0) target = $region29
    $region28: #{tpu_custom_call.1} parent=1 // pred_region
      %87 = dma.done [#allocation8], 128
    $region29: #{tpu_custom_call.1} parent=1 // pred_fallthru
      _
    // Predicated region
    $region30: #{tpu_custom_call.1} parent=1 // pred_check
      _
    $region31: #{tpu_custom_call.1} parent=1 // pred_check_branch
      %89 = sbr.rel (0) target = $region33
    $region32: #{tpu_custom_call.1} parent=1 // pred_region
      %90 = dma.done [#allocation8], 2048
    $region33: #{tpu_custom_call.1} parent=1 // pred_fallthru
      _
    // Predicated region
    $region34: #{tpu_custom_call.1} parent=1 // pred_check
      _
    $region35: #{tpu_custom_call.1} parent=1 // pred_check_branch
      %92 = sbr.rel (0) target = $region37
    $region36: #{tpu_custom_call.1} parent=1 // pred_region
      %93 = dma.done [#allocation11], 20480
    $region37: #{tpu_custom_call.1} parent=1 // pred_fallthru
      _
    // Predicated region
    $region38: #{tpu_custom_call.1} parent=1 // pred_check
      _
    $region39: #{tpu_custom_call.1} parent=1 // pred_check_branch
      %95 = sbr.rel (0) target = $region41
    $region40: #{tpu_custom_call.1} parent=1 // pred_region
      %96 = dma.done [#allocation11], 256
    $region41: #{tpu_custom_call.1} parent=1 // pred_fallthru
      _
    %s97 = sld [smem:[#allocation3]]
    %s98 = sld [smem:[#allocation3]]
    %s99 = sld [smem:[#allocation3]]
    %v101 = vld [vmem:[#allocation4] sm:$0xff]
    %v102 = vpack.c.bf16 %v101, %v101
    %v103 = vld [vmem:[#allocation9] sm:$0xff]
    %v104 = vld [vmem:[#allocation9 + $0x8] sm:$0xff]
    %v105 = vld [vmem:[#allocation9 + $0x10] sm:$0xff]
    %v106 = vld [vmem:[#allocation9 + $0x18] sm:$0xff]
    %v107 = vld [vmem:[#allocation9 + $0x20] sm:$0xff]
    %v108 = vld [vmem:[#allocation9 + $0x28] sm:$0xff]
    %v109 = vld [vmem:[#allocation9 + $0x30] sm:$0xff]
    %v110 = vld [vmem:[#allocation9 + $0x38] sm:$0xff]
    %v111 = vld [vmem:[#allocation9 + $0x40] sm:$0xff]
    %v112 = vld [vmem:[#allocation9 + $0x48] sm:$0xff]
    %v113 = vld [vmem:[#allocation9 + $0x50] sm:$0xff]
    %v114 = vld [vmem:[#allocation9 + $0x58] sm:$0xff]
    %v115 = vld [vmem:[#allocation9 + $0x60] sm:$0xff]
    %v116 = vld [vmem:[#allocation9 + $0x68] sm:$0xff]
    %v117 = vld [vmem:[#allocation9 + $0x70] sm:$0xff]
    %v118 = vld [vmem:[#allocation9 + $0x78] sm:$0xff]
    %v119 = vld [vmem:[#allocation12] ss:$8 sm:$0x3]
    %v121 = vlaneseq
    %v122 = vshrl.u32 %v121, 7
    %v123 = vsub.s32 0, %v122
    %v124 = vrot.slane %v119, %v123
    %v125 = vlaneseq
    %v126 = vshrl.u32 %v125, 7
    %v127 = vsub.s32 1, %v126
    %v128 = vrot.slane %v119, %v127
    %v147 = vunpack.c.l.b16 %v103
    %v148 = vunpack.c.h.b16 %v103
    %v149 = vunpack.c.l.b16 %v104
    %v150 = vunpack.c.h.b16 %v104
    %v151 = vunpack.c.l.b16 %v105
    %v152 = vunpack.c.h.b16 %v105
    %v153 = vunpack.c.l.b16 %v106
    %v154 = vunpack.c.h.b16 %v106
    %v155 = vunpack.c.l.b16 %v107
    %v156 = vunpack.c.h.b16 %v107
    %v157 = vunpack.c.l.b16 %v108
    %v158 = vunpack.c.h.b16 %v108
    %v159 = vunpack.c.l.b16 %v109
    %v160 = vunpack.c.h.b16 %v109
    %v161 = vunpack.c.l.b16 %v110
    %v162 = vunpack.c.h.b16 %v110
    %v163 = vunpack.c.l.b16 %v111
    %v164 = vunpack.c.h.b16 %v111
    %v165 = vunpack.c.l.b16 %v112
    %v166 = vunpack.c.h.b16 %v112
    %v167 = vunpack.c.l.b16 %v113
    %v168 = vunpack.c.h.b16 %v113
    %v169 = vunpack.c.l.b16 %v114
    %v170 = vunpack.c.h.b16 %v114
    %v171 = vunpack.c.l.b16 %v115
    %v172 = vunpack.c.h.b16 %v115
    %v173 = vunpack.c.l.b16 %v116
    %v174 = vunpack.c.h.b16 %v116
    %v175 = vunpack.c.l.b16 %v117
    %v176 = vunpack.c.h.b16 %v117
    %v177 = vunpack.c.l.b16 %v118
    %v178 = vunpack.c.h.b16 %v118
    %v179 = vpack.c.b16 %v149, %v147
    %v180 = vpack.c.b16 %v150, %v148
    %v181 = vpack.c.b16 %v153, %v151
    %v182 = vpack.c.b16 %v154, %v152
    %v183 = vpack.c.b16 %v157, %v155
    %v184 = vpack.c.b16 %v158, %v156
    %v185 = vpack.c.b16 %v161, %v159
    %v186 = vpack.c.b16 %v162, %v160
    %v187 = vpack.c.b16 %v165, %v163
    %v188 = vpack.c.b16 %v166, %v164
    %v189 = vpack.c.b16 %v169, %v167
    %v190 = vpack.c.b16 %v170, %v168
    %v191 = vpack.c.b16 %v173, %v171
    %v192 = vpack.c.b16 %v174, %v172
    %v193 = vpack.c.b16 %v177, %v175
    %v194 = vpack.c.b16 %v178, %v176
    %211 = vmatprep.subr.bf16.mxu0 %v180
    %212 = vmatpush1.bf16.msra.mxu0 %v179
    %213 = vmatprep.subr.bf16.mxu0 %v182
    %214 = vmatpush1.bf16.msra.mxu0 %v181
    %215 = vmatprep.subr.bf16.mxu0 %v184
    %216 = vmatpush1.bf16.msra.mxu0 %v183
    %217 = vmatprep.subr.bf16.mxu0 %v186
    %218 = vmatpush1.bf16.msra.mxu0 %v185
    %219 = vmatprep.subr.bf16.mxu0 %v188
    %220 = vmatpush1.bf16.msra.mxu0 %v187
    %221 = vmatprep.subr.bf16.mxu0 %v190
    %222 = vmatpush1.bf16.msra.mxu0 %v189
    %223 = vmatprep.subr.bf16.mxu0 %v192
    %224 = vmatpush1.bf16.msra.mxu0 %v191
    %225 = vmatprep.subr.bf16.mxu0 %v194
    %226 = vmatpush1.bf16.msra.mxu0 %v193
    %227 = vmatprep.subr.bf16.mxu0 0
    %228 = vmatpush1.bf16.msra.mxu0 0
    %229 = vmatprep.subr.bf16.mxu0 0
    %230 = vmatpush1.bf16.msra.mxu0 0
    %231 = vmatprep.subr.bf16.mxu0 0
    %232 = vmatpush1.bf16.msra.mxu0 0
    %233 = vmatprep.subr.bf16.mxu0 0
    %234 = vmatpush1.bf16.msra.mxu0 0
    %235 = vmatprep.subr.bf16.mxu0 0
    %236 = vmatpush1.bf16.msra.mxu0 0
    %237 = vmatprep.subr.bf16.mxu0 0
    %238 = vmatpush1.bf16.msra.mxu0 0
    %239 = vmatprep.subr.bf16.mxu0 0
    %240 = vmatpush1.bf16.msra.mxu0 0
    %241 = vmatprep.subr.bf16.mxu0 0
    %242 = vmatpush1.bf16.msra.mxu0 0
    %243 = vmatprep.mubr.bf16.mxu0 0
    %244 = vmatmul.mubr.bf16.gmra.mrb[0].mxu0 %v102
    %v245 = vpop.f32.mrb[0].mxu0
    %v246 = vadd.f32 %v124, %v245
    %v247 = vpop.f32.mrb[0].mxu0
    %v248 = vadd.f32 %v128, %v247
    %v249 = vpop.f32.mrb[0].mxu0
    %v250 = vpop.f32.mrb[0].mxu0
    %251 = vdwg.mxu0
    %v252 = vmax.f32 %v246, 0.0
    %v253 = vmax.f32 %v248, 0.0
    %v254 = vld [vmem:[#allocation10] sm:$0xff]
    %v255 = vld [vmem:[#allocation10 + $0x8] sm:$0xff]
    %v256 = vld [vmem:[#allocation10 + $0x10] sm:$0xff]
    %v257 = vld [vmem:[#allocation10 + $0x18] sm:$0xff]
    %v258 = vld [vmem:[#allocation10 + $0x20] sm:$0xff]
    %v259 = vld [vmem:[#allocation10 + $0x28] sm:$0xff]
    %v260 = vld [vmem:[#allocation10 + $0x30] sm:$0xff]
    %v261 = vld [vmem:[#allocation10 + $0x38] sm:$0xff]
    %v262 = vld [vmem:[#allocation10 + $0x40] sm:$0xff]
    %v263 = vld [vmem:[#allocation10 + $0x48] sm:$0xff]
    %v264 = vld [vmem:[#allocation10 + $0x50] sm:$0xff]
    %v265 = vld [vmem:[#allocation10 + $0x58] sm:$0xff]
    %v266 = vld [vmem:[#allocation10 + $0x60] sm:$0xff]
    %v267 = vld [vmem:[#allocation10 + $0x68] sm:$0xff]
    %v268 = vld [vmem:[#allocation10 + $0x70] sm:$0xff]
    %v269 = vld [vmem:[#allocation10 + $0x78] sm:$0xff]
    %v270 = vld [vmem:[#allocation10 + $0x80] sm:$0xff]
    %v271 = vld [vmem:[#allocation10 + $0x88] sm:$0xff]
    %v272 = vld [vmem:[#allocation10 + $0x90] sm:$0xff]
    %v273 = vld [vmem:[#allocation10 + $0x98] sm:$0xff]
    %v274 = vld [vmem:[#allocation10 + $0xa0] sm:$0xff]
    %v275 = vld [vmem:[#allocation10 + $0xa8] sm:$0xff]
    %v276 = vld [vmem:[#allocation10 + $0xb0] sm:$0xff]
    %v277 = vld [vmem:[#allocation10 + $0xb8] sm:$0xff]
    %v278 = vld [vmem:[#allocation10 + $0xc0] sm:$0xff]
    %v279 = vld [vmem:[#allocation10 + $0xc8] sm:$0xff]
    %v280 = vld [vmem:[#allocation10 + $0xd0] sm:$0xff]
    %v281 = vld [vmem:[#allocation10 + $0xd8] sm:$0xff]
    %v282 = vld [vmem:[#allocation10 + $0xe0] sm:$0xff]
    %v283 = vld [vmem:[#allocation10 + $0xe8] sm:$0xff]
    %v284 = vld [vmem:[#allocation10 + $0xf0] sm:$0xff]
    %v285 = vld [vmem:[#allocation10 + $0xf8] sm:$0xff]
    %v286 = vpack.c.bf16 %v252, %v252
    %v287 = vpack.c.bf16 %v253, %v253
    %s288 = scalar_lea.vmem [#allocation12], 1
    %v289 = vld [vmem:[%s288] ss:$8 sm:$0x3]
    %v291 = vlaneseq
    %v292 = vshrl.u32 %v291, 7
    %v293 = vsub.s32 0, %v292
    %v294 = vrot.slane %v289, %v293
    %v295 = vlaneseq
    %v296 = vshrl.u32 %v295, 7
    %v297 = vsub.s32 1, %v296
    %v298 = vrot.slane %v289, %v297
    %v333 = vunpack.c.l.b16 %v254
    %v334 = vunpack.c.h.b16 %v254
    %v335 = vunpack.c.l.b16 %v255
    %v336 = vunpack.c.h.b16 %v255
    %v337 = vunpack.c.l.b16 %v256
    %v338 = vunpack.c.h.b16 %v256
    %v339 = vunpack.c.l.b16 %v257
    %v340 = vunpack.c.h.b16 %v257
    %v341 = vunpack.c.l.b16 %v258
    %v342 = vunpack.c.h.b16 %v258
    %v343 = vunpack.c.l.b16 %v259
    %v344 = vunpack.c.h.b16 %v259
    %v345 = vunpack.c.l.b16 %v260
    %v346 = vunpack.c.h.b16 %v260
    %v347 = vunpack.c.l.b16 %v261
    %v348 = vunpack.c.h.b16 %v261
    %v349 = vunpack.c.l.b16 %v262
    %v350 = vunpack.c.h.b16 %v262
    %v351 = vunpack.c.l.b16 %v263
    %v352 = vunpack.c.h.b16 %v263
    %v353 = vunpack.c.l.b16 %v264
    %v354 = vunpack.c.h.b16 %v264
    %v355 = vunpack.c.l.b16 %v265
    %v356 = vunpack.c.h.b16 %v265
    %v357 = vunpack.c.l.b16 %v266
    %v358 = vunpack.c.h.b16 %v266
    %v359 = vunpack.c.l.b16 %v267
    %v360 = vunpack.c.h.b16 %v267
    %v361 = vunpack.c.l.b16 %v268
    %v362 = vunpack.c.h.b16 %v268
    %v363 = vunpack.c.l.b16 %v269
    %v364 = vunpack.c.h.b16 %v269
    %v365 = vunpack.c.l.b16 %v270
    %v366 = vunpack.c.h.b16 %v270
    %v367 = vunpack.c.l.b16 %v271
    %v368 = vunpack.c.h.b16 %v271
    %v369 = vunpack.c.l.b16 %v272
    %v370 = vunpack.c.h.b16 %v272
    %v371 = vunpack.c.l.b16 %v273
    %v372 = vunpack.c.h.b16 %v273
    %v373 = vunpack.c.l.b16 %v274
    %v374 = vunpack.c.h.b16 %v274
    %v375 = vunpack.c.l.b16 %v275
    %v376 = vunpack.c.h.b16 %v275
    %v377 = vunpack.c.l.b16 %v276
    %v378 = vunpack.c.h.b16 %v276
    %v379 = vunpack.c.l.b16 %v277
    %v380 = vunpack.c.h.b16 %v277
    %v381 = vunpack.c.l.b16 %v278
    %v382 = vunpack.c.h.b16 %v278
    %v383 = vunpack.c.l.b16 %v279
    %v384 = vunpack.c.h.b16 %v279
    %v385 = vunpack.c.l.b16 %v280
    %v386 = vunpack.c.h.b16 %v280
    %v387 = vunpack.c.l.b16 %v281
    %v388 = vunpack.c.h.b16 %v281
    %v389 = vunpack.c.l.b16 %v282
    %v390 = vunpack.c.h.b16 %v282
    %v391 = vunpack.c.l.b16 %v283
    %v392 = vunpack.c.h.b16 %v283
    %v393 = vunpack.c.l.b16 %v284
    %v394 = vunpack.c.h.b16 %v284
    %v395 = vunpack.c.l.b16 %v285
    %v396 = vunpack.c.h.b16 %v285
    %v397 = vpack.c.b16 %v335, %v333
    %v398 = vpack.c.b16 %v336, %v334
    %v399 = vpack.c.b16 %v339, %v337
    %v400 = vpack.c.b16 %v340, %v338
    %v401 = vpack.c.b16 %v343, %v341
    %v402 = vpack.c.b16 %v344, %v342
    %v403 = vpack.c.b16 %v347, %v345
    %v404 = vpack.c.b16 %v348, %v346
    %v405 = vpack.c.b16 %v351, %v349
    %v406 = vpack.c.b16 %v352, %v350
    %v407 = vpack.c.b16 %v355, %v353
    %v408 = vpack.c.b16 %v356, %v354
    %v409 = vpack.c.b16 %v359, %v357
    %v410 = vpack.c.b16 %v360, %v358
    %v411 = vpack.c.b16 %v363, %v361
    %v412 = vpack.c.b16 %v364, %v362
    %v413 = vpack.c.b16 %v367, %v365
    %v414 = vpack.c.b16 %v368, %v366
    %v415 = vpack.c.b16 %v371, %v369
    %v416 = vpack.c.b16 %v372, %v370
    %v417 = vpack.c.b16 %v375, %v373
    %v418 = vpack.c.b16 %v376, %v374
    %v419 = vpack.c.b16 %v379, %v377
    %v420 = vpack.c.b16 %v380, %v378
    %v421 = vpack.c.b16 %v383, %v381
    %v422 = vpack.c.b16 %v384, %v382
    %v423 = vpack.c.b16 %v387, %v385
    %v424 = vpack.c.b16 %v388, %v386
    %v425 = vpack.c.b16 %v391, %v389
    %v426 = vpack.c.b16 %v392, %v390
    %v427 = vpack.c.b16 %v395, %v393
    %v428 = vpack.c.b16 %v396, %v394
    %461 = vmatprep.subr.bf16.mxu0 %v398
    %462 = vmatpush1.bf16.msra.mxu0 %v397
    %463 = vmatprep.subr.bf16.mxu0 %v400
    %464 = vmatpush1.bf16.msra.mxu0 %v399
    %465 = vmatprep.subr.bf16.mxu0 %v402
    %466 = vmatpush1.bf16.msra.mxu0 %v401
    %467 = vmatprep.subr.bf16.mxu0 %v404
    %468 = vmatpush1.bf16.msra.mxu0 %v403
    %469 = vmatprep.subr.bf16.mxu0 %v406
    %470 = vmatpush1.bf16.msra.mxu0 %v405
    %471 = vmatprep.subr.bf16.mxu0 %v408
    %472 = vmatpush1.bf16.msra.mxu0 %v407
    %473 = vmatprep.subr.bf16.mxu0 %v410
    %474 = vmatpush1.bf16.msra.mxu0 %v409
    %475 = vmatprep.subr.bf16.mxu0 %v412
    %476 = vmatpush1.bf16.msra.mxu0 %v411
    %477 = vmatprep.subr.bf16.mxu0 %v414
    %478 = vmatpush1.bf16.msra.mxu0 %v413
    %479 = vmatprep.subr.bf16.mxu0 %v416
    %480 = vmatpush1.bf16.msra.mxu0 %v415
    %481 = vmatprep.subr.bf16.mxu0 %v418
    %482 = vmatpush1.bf16.msra.mxu0 %v417
    %483 = vmatprep.subr.bf16.mxu0 %v420
    %484 = vmatpush1.bf16.msra.mxu0 %v419
    %485 = vmatprep.subr.bf16.mxu0 %v422
    %486 = vmatpush1.bf16.msra.mxu0 %v421
    %487 = vmatprep.subr.bf16.mxu0 %v424
    %488 = vmatpush1.bf16.msra.mxu0 %v423
    %489 = vmatprep.subr.bf16.mxu0 %v426
    %490 = vmatpush1.bf16.msra.mxu0 %v425
    %491 = vmatprep.subr.bf16.mxu0 %v428
    %492 = vmatpush1.bf16.msra.mxu0 %v427
    %493 = vmatprep.mubr.bf16.mxu0 %v287
    %494 = vmatmul.mubr.bf16.gmra.mrb[0].mxu0 %v286
    %v495 = vpop.f32.mrb[0].mxu0
    %v496 = vadd.f32 %v294, %v495
    %v497 = vpop.f32.mrb[0].mxu0
    %v498 = vadd.f32 %v298, %v497
    %v499 = vpop.f32.mrb[0].mxu0
    %v500 = vpop.f32.mrb[0].mxu0
    %501 = vdwg.mxu0
    %v502 = vmax.f32 %v496, 0.0
    %v503 = vmax.f32 %v498, 0.0
    %v504 = vld [vmem:[#allocation10 + $0x100] sm:$0xff]
    %v505 = vld [vmem:[#allocation10 + $0x108] sm:$0xff]
    %v506 = vld [vmem:[#allocation10 + $0x110] sm:$0xff]
    %v507 = vld [vmem:[#allocation10 + $0x118] sm:$0xff]
    %v508 = vld [vmem:[#allocation10 + $0x120] sm:$0xff]
    %v509 = vld [vmem:[#allocation10 + $0x128] sm:$0xff]
    %v510 = vld [vmem:[#allocation10 + $0x130] sm:$0xff]
    %v511 = vld [vmem:[#allocation10 + $0x138] sm:$0xff]
    %v512 = vld [vmem:[#allocation10 + $0x140] sm:$0xff]
    %v513 = vld [vmem:[#allocation10 + $0x148] sm:$0xff]
    %v514 = vld [vmem:[#allocation10 + $0x150] sm:$0xff]
    %v515 = vld [vmem:[#allocation10 + $0x158] sm:$0xff]
    %v516 = vld [vmem:[#allocation10 + $0x160] sm:$0xff]
    %v517 = vld [vmem:[#allocation10 + $0x168] sm:$0xff]
    %v518 = vld [vmem:[#allocation10 + $0x170] sm:$0xff]
    %v519 = vld [vmem:[#allocation10 + $0x178] sm:$0xff]
    %v520 = vld [vmem:[#allocation10 + $0x180] sm:$0xff]
    %v521 = vld [vmem:[#allocation10 + $0x188] sm:$0xff]
    %v522 = vld [vmem:[#allocation10 + $0x190] sm:$0xff]
    %v523 = vld [vmem:[#allocation10 + $0x198] sm:$0xff]
    %v524 = vld [vmem:[#allocation10 + $0x1a0] sm:$0xff]
    %v525 = vld [vmem:[#allocation10 + $0x1a8] sm:$0xff]
    %v526 = vld [vmem:[#allocation10 + $0x1b0] sm:$0xff]
    %v527 = vld [vmem:[#allocation10 + $0x1b8] sm:$0xff]
    %v528 = vld [vmem:[#allocation10 + $0x1c0] sm:$0xff]
    %v529 = vld [vmem:[#allocation10 + $0x1c8] sm:$0xff]
    %v530 = vld [vmem:[#allocation10 + $0x1d0] sm:$0xff]
    %v531 = vld [vmem:[#allocation10 + $0x1d8] sm:$0xff]
    %v532 = vld [vmem:[#allocation10 + $0x1e0] sm:$0xff]
    %v533 = vld [vmem:[#allocation10 + $0x1e8] sm:$0xff]
    %v534 = vld [vmem:[#allocation10 + $0x1f0] sm:$0xff]
    %v535 = vld [vmem:[#allocation10 + $0x1f8] sm:$0xff]
    %v536 = vpack.c.bf16 %v502, %v502
    %v537 = vpack.c.bf16 %v503, %v503
    %s538 = scalar_lea.vmem [#allocation12], 2
    %v539 = vld [vmem:[%s538] ss:$8 sm:$0x3]
    %v541 = vlaneseq
    %v542 = vshrl.u32 %v541, 7
    %v543 = vsub.s32 0, %v542
    %v544 = vrot.slane %v539, %v543
    %v545 = vlaneseq
    %v546 = vshrl.u32 %v545, 7
    %v547 = vsub.s32 1, %v546
    %v548 = vrot.slane %v539, %v547
    %v583 = vunpack.c.l.b16 %v504
    %v584 = vunpack.c.h.b16 %v504
    %v585 = vunpack.c.l.b16 %v505
    %v586 = vunpack.c.h.b16 %v505
    %v587 = vunpack.c.l.b16 %v506
    %v588 = vunpack.c.h.b16 %v506
    %v589 = vunpack.c.l.b16 %v507
    %v590 = vunpack.c.h.b16 %v507
    %v591 = vunpack.c.l.b16 %v508
    %v592 = vunpack.c.h.b16 %v508
    %v593 = vunpack.c.l.b16 %v509
    %v594 = vunpack.c.h.b16 %v509
    %v595 = vunpack.c.l.b16 %v510
    %v596 = vunpack.c.h.b16 %v510
    %v597 = vunpack.c.l.b16 %v511
    %v598 = vunpack.c.h.b16 %v511
    %v599 = vunpack.c.l.b16 %v512
    %v600 = vunpack.c.h.b16 %v512
    %v601 = vunpack.c.l.b16 %v513
    %v602 = vunpack.c.h.b16 %v513
    %v603 = vunpack.c.l.b16 %v514
    %v604 = vunpack.c.h.b16 %v514
    %v605 = vunpack.c.l.b16 %v515
    %v606 = vunpack.c.h.b16 %v515
    %v607 = vunpack.c.l.b16 %v516
    %v608 = vunpack.c.h.b16 %v516
    %v609 = vunpack.c.l.b16 %v517
    %v610 = vunpack.c.h.b16 %v517
    %v611 = vunpack.c.l.b16 %v518
    %v612 = vunpack.c.h.b16 %v518
    %v613 = vunpack.c.l.b16 %v519
    %v614 = vunpack.c.h.b16 %v519
    %v615 = vunpack.c.l.b16 %v520
    %v616 = vunpack.c.h.b16 %v520
    %v617 = vunpack.c.l.b16 %v521
    %v618 = vunpack.c.h.b16 %v521
    %v619 = vunpack.c.l.b16 %v522
    %v620 = vunpack.c.h.b16 %v522
    %v621 = vunpack.c.l.b16 %v523
    %v622 = vunpack.c.h.b16 %v523
    %v623 = vunpack.c.l.b16 %v524
    %v624 = vunpack.c.h.b16 %v524
    %v625 = vunpack.c.l.b16 %v525
    %v626 = vunpack.c.h.b16 %v525
    %v627 = vunpack.c.l.b16 %v526
    %v628 = vunpack.c.h.b16 %v526
    %v629 = vunpack.c.l.b16 %v527
    %v630 = vunpack.c.h.b16 %v527
    %v631 = vunpack.c.l.b16 %v528
    %v632 = vunpack.c.h.b16 %v528
    %v633 = vunpack.c.l.b16 %v529
    %v634 = vunpack.c.h.b16 %v529
    %v635 = vunpack.c.l.b16 %v530
    %v636 = vunpack.c.h.b16 %v530
    %v637 = vunpack.c.l.b16 %v531
    %v638 = vunpack.c.h.b16 %v531
    %v639 = vunpack.c.l.b16 %v532
    %v640 = vunpack.c.h.b16 %v532
    %v641 = vunpack.c.l.b16 %v533
    %v642 = vunpack.c.h.b16 %v533
    %v643 = vunpack.c.l.b16 %v534
    %v644 = vunpack.c.h.b16 %v534
    %v645 = vunpack.c.l.b16 %v535
    %v646 = vunpack.c.h.b16 %v535
    %v647 = vpack.c.b16 %v585, %v583
    %v648 = vpack.c.b16 %v586, %v584
    %v649 = vpack.c.b16 %v589, %v587
    %v650 = vpack.c.b16 %v590, %v588
    %v651 = vpack.c.b16 %v593, %v591
    %v652 = vpack.c.b16 %v594, %v592
    %v653 = vpack.c.b16 %v597, %v595
    %v654 = vpack.c.b16 %v598, %v596
    %v655 = vpack.c.b16 %v601, %v599
    %v656 = vpack.c.b16 %v602, %v600
    %v657 = vpack.c.b16 %v605, %v603
    %v658 = vpack.c.b16 %v606, %v604
    %v659 = vpack.c.b16 %v609, %v607
    %v660 = vpack.c.b16 %v610, %v608
    %v661 = vpack.c.b16 %v613, %v611
    %v662 = vpack.c.b16 %v614, %v612
    %v663 = vpack.c.b16 %v617, %v615
    %v664 = vpack.c.b16 %v618, %v616
    %v665 = vpack.c.b16 %v621, %v619
    %v666 = vpack.c.b16 %v622, %v620
    %v667 = vpack.c.b16 %v625, %v623
    %v668 = vpack.c.b16 %v626, %v624
    %v669 = vpack.c.b16 %v629, %v627
    %v670 = vpack.c.b16 %v630, %v628
    %v671 = vpack.c.b16 %v633, %v631
    %v672 = vpack.c.b16 %v634, %v632
    %v673 = vpack.c.b16 %v637, %v635
    %v674 = vpack.c.b16 %v638, %v636
    %v675 = vpack.c.b16 %v641, %v639
    %v676 = vpack.c.b16 %v642, %v640
    %v677 = vpack.c.b16 %v645, %v643
    %v678 = vpack.c.b16 %v646, %v644
    %711 = vmatprep.subr.bf16.mxu0 %v648
    %712 = vmatpush1.bf16.msra.mxu0 %v647
    %713 = vmatprep.subr.bf16.mxu0 %v650
    %714 = vmatpush1.bf16.msra.mxu0 %v649
    %715 = vmatprep.subr.bf16.mxu0 %v652
    %716 = vmatpush1.bf16.msra.mxu0 %v651
    %717 = vmatprep.subr.bf16.mxu0 %v654
    %718 = vmatpush1.bf16.msra.mxu0 %v653
    %719 = vmatprep.subr.bf16.mxu0 %v656
    %720 = vmatpush1.bf16.msra.mxu0 %v655
    %721 = vmatprep.subr.bf16.mxu0 %v658
    %722 = vmatpush1.bf16.msra.mxu0 %v657
    %723 = vmatprep.subr.bf16.mxu0 %v660
    %724 = vmatpush1.bf16.msra.mxu0 %v659
    %725 = vmatprep.subr.bf16.mxu0 %v662
    %726 = vmatpush1.bf16.msra.mxu0 %v661
    %727 = vmatprep.subr.bf16.mxu0 %v664
    %728 = vmatpush1.bf16.msra.mxu0 %v663
    %729 = vmatprep.subr.bf16.mxu0 %v666
    %730 = vmatpush1.bf16.msra.mxu0 %v665
    %731 = vmatprep.subr.bf16.mxu0 %v668
    %732 = vmatpush1.bf16.msra.mxu0 %v667
    %733 = vmatprep.subr.bf16.mxu0 %v670
    %734 = vmatpush1.bf16.msra.mxu0 %v669
    %735 = vmatprep.subr.bf16.mxu0 %v672
    %736 = vmatpush1.bf16.msra.mxu0 %v671
    %737 = vmatprep.subr.bf16.mxu0 %v674
    %738 = vmatpush1.bf16.msra.mxu0 %v673
    %739 = vmatprep.subr.bf16.mxu0 %v676
    %740 = vmatpush1.bf16.msra.mxu0 %v675
    %741 = vmatprep.subr.bf16.mxu0 %v678
    %742 = vmatpush1.bf16.msra.mxu0 %v677
    %743 = vmatprep.mubr.bf16.mxu0 %v537
    %744 = vmatmul.mubr.bf16.gmra.mrb[0].mxu0 %v536
    %v745 = vpop.f32.mrb[0].mxu0
    %v746 = vadd.f32 %v544, %v745
    %v747 = vpop.f32.mrb[0].mxu0
    %v748 = vadd.f32 %v548, %v747
    %v749 = vpop.f32.mrb[0].mxu0
    %v750 = vpop.f32.mrb[0].mxu0
    %751 = vdwg.mxu0
    %v752 = vmax.f32 %v746, 0.0
    %v753 = vmax.f32 %v748, 0.0
    %v754 = vld [vmem:[#allocation10 + $0x200] sm:$0xff]
    %v755 = vld [vmem:[#allocation10 + $0x208] sm:$0xff]
    %v756 = vld [vmem:[#allocation10 + $0x210] sm:$0xff]
    %v757 = vld [vmem:[#allocation10 + $0x218] sm:$0xff]
    %v758 = vld [vmem:[#allocation10 + $0x220] sm:$0xff]
    %v759 = vld [vmem:[#allocation10 + $0x228] sm:$0xff]
    %v760 = vld [vmem:[#allocation10 + $0x230] sm:$0xff]
    %v761 = vld [vmem:[#allocation10 + $0x238] sm:$0xff]
    %v762 = vld [vmem:[#allocation10 + $0x240] sm:$0xff]
    %v763 = vld [vmem:[#allocation10 + $0x248] sm:$0xff]
    %v764 = vld [vmem:[#allocation10 + $0x250] sm:$0xff]
    %v765 = vld [vmem:[#allocation10 + $0x258] sm:$0xff]
    %v766 = vld [vmem:[#allocation10 + $0x260] sm:$0xff]
    %v767 = vld [vmem:[#allocation10 + $0x268] sm:$0xff]
    %v768 = vld [vmem:[#allocation10 + $0x270] sm:$0xff]
    %v769 = vld [vmem:[#allocation10 + $0x278] sm:$0xff]
    %v770 = vld [vmem:[#allocation10 + $0x280] sm:$0xff]
    %v771 = vld [vmem:[#allocation10 + $0x288] sm:$0xff]
    %v772 = vld [vmem:[#allocation10 + $0x290] sm:$0xff]
    %v773 = vld [vmem:[#allocation10 + $0x298] sm:$0xff]
    %v774 = vld [vmem:[#allocation10 + $0x2a0] sm:$0xff]
    %v775 = vld [vmem:[#allocation10 + $0x2a8] sm:$0xff]
    %v776 = vld [vmem:[#allocation10 + $0x2b0] sm:$0xff]
    %v777 = vld [vmem:[#allocation10 + $0x2b8] sm:$0xff]
    %v778 = vld [vmem:[#allocation10 + $0x2c0] sm:$0xff]
    %v779 = vld [vmem:[#allocation10 + $0x2c8] sm:$0xff]
    %v780 = vld [vmem:[#allocation10 + $0x2d0] sm:$0xff]
    %v781 = vld [vmem:[#allocation10 + $0x2d8] sm:$0xff]
    %v782 = vld [vmem:[#allocation10 + $0x2e0] sm:$0xff]
    %v783 = vld [vmem:[#allocation10 + $0x2e8] sm:$0xff]
    %v784 = vld [vmem:[#allocation10 + $0x2f0] sm:$0xff]
    %v785 = vld [vmem:[#allocation10 + $0x2f8] sm:$0xff]
    %v786 = vpack.c.bf16 %v752, %v752
    %v787 = vpack.c.bf16 %v753, %v753
    %s788 = scalar_lea.vmem [#allocation12], 3
    %v789 = vld [vmem:[%s788] ss:$8 sm:$0x3]
    %v791 = vlaneseq
    %v792 = vshrl.u32 %v791, 7
    %v793 = vsub.s32 0, %v792
    %v794 = vrot.slane %v789, %v793
    %v795 = vlaneseq
    %v796 = vshrl.u32 %v795, 7
    %v797 = vsub.s32 1, %v796
    %v798 = vrot.slane %v789, %v797
    %v833 = vunpack.c.l.b16 %v754
    %v834 = vunpack.c.h.b16 %v754
    %v835 = vunpack.c.l.b16 %v755
    %v836 = vunpack.c.h.b16 %v755
    %v837 = vunpack.c.l.b16 %v756
    %v838 = vunpack.c.h.b16 %v756
    %v839 = vunpack.c.l.b16 %v757
    %v840 = vunpack.c.h.b16 %v757
    %v841 = vunpack.c.l.b16 %v758
    %v842 = vunpack.c.h.b16 %v758
    %v843 = vunpack.c.l.b16 %v759
    %v844 = vunpack.c.h.b16 %v759
    %v845 = vunpack.c.l.b16 %v760
    %v846 = vunpack.c.h.b16 %v760
    %v847 = vunpack.c.l.b16 %v761
    %v848 = vunpack.c.h.b16 %v761
    %v849 = vunpack.c.l.b16 %v762
    %v850 = vunpack.c.h.b16 %v762
    %v851 = vunpack.c.l.b16 %v763
    %v852 = vunpack.c.h.b16 %v763
    %v853 = vunpack.c.l.b16 %v764
    %v854 = vunpack.c.h.b16 %v764
    %v855 = vunpack.c.l.b16 %v765
    %v856 = vunpack.c.h.b16 %v765
    %v857 = vunpack.c.l.b16 %v766
    %v858 = vunpack.c.h.b16 %v766
    %v859 = vunpack.c.l.b16 %v767
    %v860 = vunpack.c.h.b16 %v767
    %v861 = vunpack.c.l.b16 %v768
    %v862 = vunpack.c.h.b16 %v768
    %v863 = vunpack.c.l.b16 %v769
    %v864 = vunpack.c.h.b16 %v769
    %v865 = vunpack.c.l.b16 %v770
    %v866 = vunpack.c.h.b16 %v770
    %v867 = vunpack.c.l.b16 %v771
    %v868 = vunpack.c.h.b16 %v771
    %v869 = vunpack.c.l.b16 %v772
    %v870 = vunpack.c.h.b16 %v772
    %v871 = vunpack.c.l.b16 %v773
    %v872 = vunpack.c.h.b16 %v773
    %v873 = vunpack.c.l.b16 %v774
    %v874 = vunpack.c.h.b16 %v774
    %v875 = vunpack.c.l.b16 %v775
    %v876 = vunpack.c.h.b16 %v775
    %v877 = vunpack.c.l.b16 %v776
    %v878 = vunpack.c.h.b16 %v776
    %v879 = vunpack.c.l.b16 %v777
    %v880 = vunpack.c.h.b16 %v777
    %v881 = vunpack.c.l.b16 %v778
    %v882 = vunpack.c.h.b16 %v778
    %v883 = vunpack.c.l.b16 %v779
    %v884 = vunpack.c.h.b16 %v779
    %v885 = vunpack.c.l.b16 %v780
    %v886 = vunpack.c.h.b16 %v780
    %v887 = vunpack.c.l.b16 %v781
    %v888 = vunpack.c.h.b16 %v781
    %v889 = vunpack.c.l.b16 %v782
    %v890 = vunpack.c.h.b16 %v782
    %v891 = vunpack.c.l.b16 %v783
    %v892 = vunpack.c.h.b16 %v783
    %v893 = vunpack.c.l.b16 %v784
    %v894 = vunpack.c.h.b16 %v784
    %v895 = vunpack.c.l.b16 %v785
    %v896 = vunpack.c.h.b16 %v785
    %v897 = vpack.c.b16 %v835, %v833
    %v898 = vpack.c.b16 %v836, %v834
    %v899 = vpack.c.b16 %v839, %v837
    %v900 = vpack.c.b16 %v840, %v838
    %v901 = vpack.c.b16 %v843, %v841
    %v902 = vpack.c.b16 %v844, %v842
    %v903 = vpack.c.b16 %v847, %v845
    %v904 = vpack.c.b16 %v848, %v846
    %v905 = vpack.c.b16 %v851, %v849
    %v906 = vpack.c.b16 %v852, %v850
    %v907 = vpack.c.b16 %v855, %v853
    %v908 = vpack.c.b16 %v856, %v854
    %v909 = vpack.c.b16 %v859, %v857
    %v910 = vpack.c.b16 %v860, %v858
    %v911 = vpack.c.b16 %v863, %v861
    %v912 = vpack.c.b16 %v864, %v862
    %v913 = vpack.c.b16 %v867, %v865
    %v914 = vpack.c.b16 %v868, %v866
    %v915 = vpack.c.b16 %v871, %v869
    %v916 = vpack.c.b16 %v872, %v870
    %v917 = vpack.c.b16 %v875, %v873
    %v918 = vpack.c.b16 %v876, %v874
    %v919 = vpack.c.b16 %v879, %v877
    %v920 = vpack.c.b16 %v880, %v878
    %v921 = vpack.c.b16 %v883, %v881
    %v922 = vpack.c.b16 %v884, %v882
    %v923 = vpack.c.b16 %v887, %v885
    %v924 = vpack.c.b16 %v888, %v886
    %v925 = vpack.c.b16 %v891, %v889
    %v926 = vpack.c.b16 %v892, %v890
    %v927 = vpack.c.b16 %v895, %v893
    %v928 = vpack.c.b16 %v896, %v894
    %961 = vmatprep.subr.bf16.mxu0 %v898
    %962 = vmatpush1.bf16.msra.mxu0 %v897
    %963 = vmatprep.subr.bf16.mxu0 %v900
    %964 = vmatpush1.bf16.msra.mxu0 %v899
    %965 = vmatprep.subr.bf16.mxu0 %v902
    %966 = vmatpush1.bf16.msra.mxu0 %v901
    %967 = vmatprep.subr.bf16.mxu0 %v904
    %968 = vmatpush1.bf16.msra.mxu0 %v903
    %969 = vmatprep.subr.bf16.mxu0 %v906
    %970 = vmatpush1.bf16.msra.mxu0 %v905
    %971 = vmatprep.subr.bf16.mxu0 %v908
    %972 = vmatpush1.bf16.msra.mxu0 %v907
    %973 = vmatprep.subr.bf16.mxu0 %v910
    %974 = vmatpush1.bf16.msra.mxu0 %v909
    %975 = vmatprep.subr.bf16.mxu0 %v912
    %976 = vmatpush1.bf16.msra.mxu0 %v911
    %977 = vmatprep.subr.bf16.mxu0 %v914
    %978 = vmatpush1.bf16.msra.mxu0 %v913
    %979 = vmatprep.subr.bf16.mxu0 %v916
    %980 = vmatpush1.bf16.msra.mxu0 %v915
    %981 = vmatprep.subr.bf16.mxu0 %v918
    %982 = vmatpush1.bf16.msra.mxu0 %v917
    %983 = vmatprep.subr.bf16.mxu0 %v920
    %984 = vmatpush1.bf16.msra.mxu0 %v919
    %985 = vmatprep.subr.bf16.mxu0 %v922
    %986 = vmatpush1.bf16.msra.mxu0 %v921
    %987 = vmatprep.subr.bf16.mxu0 %v924
    %988 = vmatpush1.bf16.msra.mxu0 %v923
    %989 = vmatprep.subr.bf16.mxu0 %v926
    %990 = vmatpush1.bf16.msra.mxu0 %v925
    %991 = vmatprep.subr.bf16.mxu0 %v928
    %992 = vmatpush1.bf16.msra.mxu0 %v927
    %993 = vmatprep.mubr.bf16.mxu0 %v787
    %994 = vmatmul.mubr.bf16.gmra.mrb[0].mxu0 %v786
    %v995 = vpop.f32.mrb[0].mxu0
    %v996 = vadd.f32 %v794, %v995
    %v997 = vpop.f32.mrb[0].mxu0
    %v998 = vadd.f32 %v798, %v997
    %v999 = vpop.f32.mrb[0].mxu0
    %v1000 = vpop.f32.mrb[0].mxu0
    %1001 = vdwg.mxu0
    %v1002 = vmax.f32 %v996, 0.0
    %v1003 = vmax.f32 %v998, 0.0
    %v1004 = vld [vmem:[#allocation10 + $0x300] sm:$0xff]
    %v1005 = vld [vmem:[#allocation10 + $0x308] sm:$0xff]
    %v1006 = vld [vmem:[#allocation10 + $0x310] sm:$0xff]
    %v1007 = vld [vmem:[#allocation10 + $0x318] sm:$0xff]
    %v1008 = vld [vmem:[#allocation10 + $0x320] sm:$0xff]
    %v1009 = vld [vmem:[#allocation10 + $0x328] sm:$0xff]
    %v1010 = vld [vmem:[#allocation10 + $0x330] sm:$0xff]
    %v1011 = vld [vmem:[#allocation10 + $0x338] sm:$0xff]
    %v1012 = vld [vmem:[#allocation10 + $0x340] sm:$0xff]
    %v1013 = vld [vmem:[#allocation10 + $0x348] sm:$0xff]
    %v1014 = vld [vmem:[#allocation10 + $0x350] sm:$0xff]
    %v1015 = vld [vmem:[#allocation10 + $0x358] sm:$0xff]
    %v1016 = vld [vmem:[#allocation10 + $0x360] sm:$0xff]
    %v1017 = vld [vmem:[#allocation10 + $0x368] sm:$0xff]
    %v1018 = vld [vmem:[#allocation10 + $0x370] sm:$0xff]
    %v1019 = vld [vmem:[#allocation10 + $0x378] sm:$0xff]
    %v1020 = vld [vmem:[#allocation10 + $0x380] sm:$0xff]
    %v1021 = vld [vmem:[#allocation10 + $0x388] sm:$0xff]
    %v1022 = vld [vmem:[#allocation10 + $0x390] sm:$0xff]
    %v1023 = vld [vmem:[#allocation10 + $0x398] sm:$0xff]
    %v1024 = vld [vmem:[#allocation10 + $0x3a0] sm:$0xff]
    %v1025 = vld [vmem:[#allocation10 + $0x3a8] sm:$0xff]
    %v1026 = vld [vmem:[#allocation10 + $0x3b0] sm:$0xff]
    %v1027 = vld [vmem:[#allocation10 + $0x3b8] sm:$0xff]
    %v1028 = vld [vmem:[#allocation10 + $0x3c0] sm:$0xff]
    %v1029 = vld [vmem:[#allocation10 + $0x3c8] sm:$0xff]
    %v1030 = vld [vmem:[#allocation10 + $0x3d0] sm:$0xff]
    %v1031 = vld [vmem:[#allocation10 + $0x3d8] sm:$0xff]
    %v1032 = vld [vmem:[#allocation10 + $0x3e0] sm:$0xff]
    %v1033 = vld [vmem:[#allocation10 + $0x3e8] sm:$0xff]
    %v1034 = vld [vmem:[#allocation10 + $0x3f0] sm:$0xff]
    %v1035 = vld [vmem:[#allocation10 + $0x3f8] sm:$0xff]
    %v1036 = vpack.c.bf16 %v1002, %v1002
    %v1037 = vpack.c.bf16 %v1003, %v1003
    %s1038 = scalar_lea.vmem [#allocation12], 4
    %v1039 = vld [vmem:[%s1038] ss:$8 sm:$0x3]
    %v1041 = vlaneseq
    %v1042 = vshrl.u32 %v1041, 7
    %v1043 = vsub.s32 0, %v1042
    %v1044 = vrot.slane %v1039, %v1043
    %v1045 = vlaneseq
    %v1046 = vshrl.u32 %v1045, 7
    %v1047 = vsub.s32 1, %v1046
    %v1048 = vrot.slane %v1039, %v1047
    %v1083 = vunpack.c.l.b16 %v1004
    %v1084 = vunpack.c.h.b16 %v1004
    %v1085 = vunpack.c.l.b16 %v1005
    %v1086 = vunpack.c.h.b16 %v1005
    %v1087 = vunpack.c.l.b16 %v1006
    %v1088 = vunpack.c.h.b16 %v1006
    %v1089 = vunpack.c.l.b16 %v1007
    %v1090 = vunpack.c.h.b16 %v1007
    %v1091 = vunpack.c.l.b16 %v1008
    %v1092 = vunpack.c.h.b16 %v1008
    %v1093 = vunpack.c.l.b16 %v1009
    %v1094 = vunpack.c.h.b16 %v1009
    %v1095 = vunpack.c.l.b16 %v1010
    %v1096 = vunpack.c.h.b16 %v1010
    %v1097 = vunpack.c.l.b16 %v1011
    %v1098 = vunpack.c.h.b16 %v1011
    %v1099 = vunpack.c.l.b16 %v1012
    %v1100 = vunpack.c.h.b16 %v1012
    %v1101 = vunpack.c.l.b16 %v1013
    %v1102 = vunpack.c.h.b16 %v1013
    %v1103 = vunpack.c.l.b16 %v1014
    %v1104 = vunpack.c.h.b16 %v1014
    %v1105 = vunpack.c.l.b16 %v1015
    %v1106 = vunpack.c.h.b16 %v1015
    %v1107 = vunpack.c.l.b16 %v1016
    %v1108 = vunpack.c.h.b16 %v1016
    %v1109 = vunpack.c.l.b16 %v1017
    %v1110 = vunpack.c.h.b16 %v1017
    %v1111 = vunpack.c.l.b16 %v1018
    %v1112 = vunpack.c.h.b16 %v1018
    %v1113 = vunpack.c.l.b16 %v1019
    %v1114 = vunpack.c.h.b16 %v1019
    %v1115 = vunpack.c.l.b16 %v1020
    %v1116 = vunpack.c.h.b16 %v1020
    %v1117 = vunpack.c.l.b16 %v1021
    %v1118 = vunpack.c.h.b16 %v1021
    %v1119 = vunpack.c.l.b16 %v1022
    %v1120 = vunpack.c.h.b16 %v1022
    %v1121 = vunpack.c.l.b16 %v1023
    %v1122 = vunpack.c.h.b16 %v1023
    %v1123 = vunpack.c.l.b16 %v1024
    %v1124 = vunpack.c.h.b16 %v1024
    %v1125 = vunpack.c.l.b16 %v1025
    %v1126 = vunpack.c.h.b16 %v1025
    %v1127 = vunpack.c.l.b16 %v1026
    %v1128 = vunpack.c.h.b16 %v1026
    %v1129 = vunpack.c.l.b16 %v1027
    %v1130 = vunpack.c.h.b16 %v1027
    %v1131 = vunpack.c.l.b16 %v1028
    %v1132 = vunpack.c.h.b16 %v1028
    %v1133 = vunpack.c.l.b16 %v1029
    %v1134 = vunpack.c.h.b16 %v1029
    %v1135 = vunpack.c.l.b16 %v1030
    %v1136 = vunpack.c.h.b16 %v1030
    %v1137 = vunpack.c.l.b16 %v1031
    %v1138 = vunpack.c.h.b16 %v1031
    %v1139 = vunpack.c.l.b16 %v1032
    %v1140 = vunpack.c.h.b16 %v1032
    %v1141 = vunpack.c.l.b16 %v1033
    %v1142 = vunpack.c.h.b16 %v1033
    %v1143 = vunpack.c.l.b16 %v1034
    %v1144 = vunpack.c.h.b16 %v1034
    %v1145 = vunpack.c.l.b16 %v1035
    %v1146 = vunpack.c.h.b16 %v1035
    %v1147 = vpack.c.b16 %v1085, %v1083
    %v1148 = vpack.c.b16 %v1086, %v1084
    %v1149 = vpack.c.b16 %v1089, %v1087
    %v1150 = vpack.c.b16 %v1090, %v1088
    %v1151 = vpack.c.b16 %v1093, %v1091
    %v1152 = vpack.c.b16 %v1094, %v1092
    %v1153 = vpack.c.b16 %v1097, %v1095
    %v1154 = vpack.c.b16 %v1098, %v1096
    %v1155 = vpack.c.b16 %v1101, %v1099
    %v1156 = vpack.c.b16 %v1102, %v1100
    %v1157 = vpack.c.b16 %v1105, %v1103
    %v1158 = vpack.c.b16 %v1106, %v1104
    %v1159 = vpack.c.b16 %v1109, %v1107
    %v1160 = vpack.c.b16 %v1110, %v1108
    %v1161 = vpack.c.b16 %v1113, %v1111
    %v1162 = vpack.c.b16 %v1114, %v1112
    %v1163 = vpack.c.b16 %v1117, %v1115
    %v1164 = vpack.c.b16 %v1118, %v1116
    %v1165 = vpack.c.b16 %v1121, %v1119
    %v1166 = vpack.c.b16 %v1122, %v1120
    %v1167 = vpack.c.b16 %v1125, %v1123
    %v1168 = vpack.c.b16 %v1126, %v1124
    %v1169 = vpack.c.b16 %v1129, %v1127
    %v1170 = vpack.c.b16 %v1130, %v1128
    %v1171 = vpack.c.b16 %v1133, %v1131
    %v1172 = vpack.c.b16 %v1134, %v1132
    %v1173 = vpack.c.b16 %v1137, %v1135
    %v1174 = vpack.c.b16 %v1138, %v1136
    %v1175 = vpack.c.b16 %v1141, %v1139
    %v1176 = vpack.c.b16 %v1142, %v1140
    %v1177 = vpack.c.b16 %v1145, %v1143
    %v1178 = vpack.c.b16 %v1146, %v1144
    %1211 = vmatprep.subr.bf16.mxu0 %v1148
    %1212 = vmatpush1.bf16.msra.mxu0 %v1147
    %1213 = vmatprep.subr.bf16.mxu0 %v1150
    %1214 = vmatpush1.bf16.msra.mxu0 %v1149
    %1215 = vmatprep.subr.bf16.mxu0 %v1152
    %1216 = vmatpush1.bf16.msra.mxu0 %v1151
    %1217 = vmatprep.subr.bf16.mxu0 %v1154
    %1218 = vmatpush1.bf16.msra.mxu0 %v1153
    %1219 = vmatprep.subr.bf16.mxu0 %v1156
    %1220 = vmatpush1.bf16.msra.mxu0 %v1155
    %1221 = vmatprep.subr.bf16.mxu0 %v1158
    %1222 = vmatpush1.bf16.msra.mxu0 %v1157
    %1223 = vmatprep.subr.bf16.mxu0 %v1160
    %1224 = vmatpush1.bf16.msra.mxu0 %v1159
    %1225 = vmatprep.subr.bf16.mxu0 %v1162
    %1226 = vmatpush1.bf16.msra.mxu0 %v1161
    %1227 = vmatprep.subr.bf16.mxu0 %v1164
    %1228 = vmatpush1.bf16.msra.mxu0 %v1163
    %1229 = vmatprep.subr.bf16.mxu0 %v1166
    %1230 = vmatpush1.bf16.msra.mxu0 %v1165
    %1231 = vmatprep.subr.bf16.mxu0 %v1168
    %1232 = vmatpush1.bf16.msra.mxu0 %v1167
    %1233 = vmatprep.subr.bf16.mxu0 %v1170
    %1234 = vmatpush1.bf16.msra.mxu0 %v1169
    %1235 = vmatprep.subr.bf16.mxu0 %v1172
    %1236 = vmatpush1.bf16.msra.mxu0 %v1171
    %1237 = vmatprep.subr.bf16.mxu0 %v1174
    %1238 = vmatpush1.bf16.msra.mxu0 %v1173
    %1239 = vmatprep.subr.bf16.mxu0 %v1176
    %1240 = vmatpush1.bf16.msra.mxu0 %v1175
    %1241 = vmatprep.subr.bf16.mxu0 %v1178
    %1242 = vmatpush1.bf16.msra.mxu0 %v1177
    %1243 = vmatprep.mubr.bf16.mxu0 %v1037
    %1244 = vmatmul.mubr.bf16.gmra.mrb[0].mxu0 %v1036
    %v1245 = vpop.f32.mrb[0].mxu0
    %v1246 = vadd.f32 %v1044, %v1245
    %v1247 = vpop.f32.mrb[0].mxu0
    %v1248 = vadd.f32 %v1048, %v1247
    %v1249 = vpop.f32.mrb[0].mxu0
    %v1250 = vpop.f32.mrb[0].mxu0
    %1251 = vdwg.mxu0
    %v1252 = vlaneseq
    %v1253 = vand.u32 %v1252, 127
    %v1254 = vadd.s32 %v1253, 128
    %vm1255 = vcmp.lt.s32.totalorder %v1253, 64
    %vm1256 = vcmp.lt.s32.totalorder %v1254, 64
    %v1257 = vmax.f32 %v1246, 0.0
    %v1258 = vmax.f32 %v1248, 0.0
    %v1259 = vsel %vm1255, %v1257, %v1246
    %v1260 = vsel %vm1256, %v1258, %v1248
    %v1261 = vld [vmem:[#allocation10 + $0x400] sm:$0xff]
    %v1262 = vld [vmem:[#allocation10 + $0x408] sm:$0xff]
    %v1263 = vld [vmem:[#allocation10 + $0x410] sm:$0xff]
    %v1264 = vld [vmem:[#allocation10 + $0x418] sm:$0xff]
    %v1265 = vld [vmem:[#allocation10 + $0x420] sm:$0xff]
    %v1266 = vld [vmem:[#allocation10 + $0x428] sm:$0xff]
    %v1267 = vld [vmem:[#allocation10 + $0x430] sm:$0xff]
    %v1268 = vld [vmem:[#allocation10 + $0x438] sm:$0xff]
    %v1269 = vld [vmem:[#allocation10 + $0x440] sm:$0xff]
    %v1270 = vld [vmem:[#allocation10 + $0x448] sm:$0xff]
    %v1271 = vld [vmem:[#allocation10 + $0x450] sm:$0xff]
    %v1272 = vld [vmem:[#allocation10 + $0x458] sm:$0xff]
    %v1273 = vld [vmem:[#allocation10 + $0x460] sm:$0xff]
    %v1274 = vld [vmem:[#allocation10 + $0x468] sm:$0xff]
    %v1275 = vld [vmem:[#allocation10 + $0x470] sm:$0xff]
    %v1276 = vld [vmem:[#allocation10 + $0x478] sm:$0xff]
    %v1277 = vld [vmem:[#allocation10 + $0x480] sm:$0xff]
    %v1278 = vld [vmem:[#allocation10 + $0x488] sm:$0xff]
    %v1279 = vld [vmem:[#allocation10 + $0x490] sm:$0xff]
    %v1280 = vld [vmem:[#allocation10 + $0x498] sm:$0xff]
    %v1281 = vld [vmem:[#allocation10 + $0x4a0] sm:$0xff]
    %v1282 = vld [vmem:[#allocation10 + $0x4a8] sm:$0xff]
    %v1283 = vld [vmem:[#allocation10 + $0x4b0] sm:$0xff]
    %v1284 = vld [vmem:[#allocation10 + $0x4b8] sm:$0xff]
    %v1285 = vld [vmem:[#allocation10 + $0x4c0] sm:$0xff]
    %v1286 = vld [vmem:[#allocation10 + $0x4c8] sm:$0xff]
    %v1287 = vld [vmem:[#allocation10 + $0x4d0] sm:$0xff]
    %v1288 = vld [vmem:[#allocation10 + $0x4d8] sm:$0xff]
    %v1289 = vld [vmem:[#allocation10 + $0x4e0] sm:$0xff]
    %v1290 = vld [vmem:[#allocation10 + $0x4e8] sm:$0xff]
    %v1291 = vld [vmem:[#allocation10 + $0x4f0] sm:$0xff]
    %v1292 = vld [vmem:[#allocation10 + $0x4f8] sm:$0xff]
    %v1293 = vpack.c.bf16 %v1259, %v1259
    %v1294 = vpack.c.bf16 %v1260, %v1260
    %s1295 = scalar_lea.vmem [#allocation12], 5
    %v1296 = vld [vmem:[%s1295] ss:$8 sm:$0x3]
    %v1298 = vlaneseq
    %v1299 = vshrl.u32 %v1298, 7
    %v1300 = vsub.s32 0, %v1299
    %v1301 = vrot.slane %v1296, %v1300
    %v1335 = vunpack.c.l.b16 %v1261
    %v1336 = vunpack.c.h.b16 %v1261
    %v1337 = vunpack.c.l.b16 %v1262
    %v1338 = vunpack.c.h.b16 %v1262
    %v1339 = vunpack.c.l.b16 %v1263
    %v1340 = vunpack.c.h.b16 %v1263
    %v1341 = vunpack.c.l.b16 %v1264
    %v1342 = vunpack.c.h.b16 %v1264
    %v1343 = vunpack.c.l.b16 %v1265
    %v1344 = vunpack.c.h.b16 %v1265
    %v1345 = vunpack.c.l.b16 %v1266
    %v1346 = vunpack.c.h.b16 %v1266
    %v1347 = vunpack.c.l.b16 %v1267
    %v1348 = vunpack.c.h.b16 %v1267
    %v1349 = vunpack.c.l.b16 %v1268
    %v1350 = vunpack.c.h.b16 %v1268
    %v1351 = vunpack.c.l.b16 %v1269
    %v1352 = vunpack.c.h.b16 %v1269
    %v1353 = vunpack.c.l.b16 %v1270
    %v1354 = vunpack.c.h.b16 %v1270
    %v1355 = vunpack.c.l.b16 %v1271
    %v1356 = vunpack.c.h.b16 %v1271
    %v1357 = vunpack.c.l.b16 %v1272
    %v1358 = vunpack.c.h.b16 %v1272
    %v1359 = vunpack.c.l.b16 %v1273
    %v1360 = vunpack.c.h.b16 %v1273
    %v1361 = vunpack.c.l.b16 %v1274
    %v1362 = vunpack.c.h.b16 %v1274
    %v1363 = vunpack.c.l.b16 %v1275
    %v1364 = vunpack.c.h.b16 %v1275
    %v1365 = vunpack.c.l.b16 %v1276
    %v1366 = vunpack.c.h.b16 %v1276
    %v1367 = vunpack.c.l.b16 %v1277
    %v1368 = vunpack.c.h.b16 %v1277
    %v1369 = vunpack.c.l.b16 %v1278
    %v1370 = vunpack.c.h.b16 %v1278
    %v1371 = vunpack.c.l.b16 %v1279
    %v1372 = vunpack.c.h.b16 %v1279
    %v1373 = vunpack.c.l.b16 %v1280
    %v1374 = vunpack.c.h.b16 %v1280
    %v1375 = vunpack.c.l.b16 %v1281
    %v1376 = vunpack.c.h.b16 %v1281
    %v1377 = vunpack.c.l.b16 %v1282
    %v1378 = vunpack.c.h.b16 %v1282
    %v1379 = vunpack.c.l.b16 %v1283
    %v1380 = vunpack.c.h.b16 %v1283
    %v1381 = vunpack.c.l.b16 %v1284
    %v1382 = vunpack.c.h.b16 %v1284
    %v1383 = vunpack.c.l.b16 %v1285
    %v1384 = vunpack.c.h.b16 %v1285
    %v1385 = vunpack.c.l.b16 %v1286
    %v1386 = vunpack.c.h.b16 %v1286
    %v1387 = vunpack.c.l.b16 %v1287
    %v1388 = vunpack.c.h.b16 %v1287
    %v1389 = vunpack.c.l.b16 %v1288
    %v1390 = vunpack.c.h.b16 %v1288
    %v1391 = vunpack.c.l.b16 %v1289
    %v1392 = vunpack.c.h.b16 %v1289
    %v1393 = vunpack.c.l.b16 %v1290
    %v1394 = vunpack.c.h.b16 %v1290
    %v1395 = vunpack.c.l.b16 %v1291
    %v1396 = vunpack.c.h.b16 %v1291
    %v1397 = vunpack.c.l.b16 %v1292
    %v1398 = vunpack.c.h.b16 %v1292
    %v1399 = vpack.c.b16 %v1337, %v1335
    %v1400 = vpack.c.b16 %v1338, %v1336
    %v1401 = vpack.c.b16 %v1341, %v1339
    %v1402 = vpack.c.b16 %v1342, %v1340
    %v1403 = vpack.c.b16 %v1345, %v1343
    %v1404 = vpack.c.b16 %v1346, %v1344
    %v1405 = vpack.c.b16 %v1349, %v1347
    %v1406 = vpack.c.b16 %v1350, %v1348
    %v1407 = vpack.c.b16 %v1353, %v1351
    %v1408 = vpack.c.b16 %v1354, %v1352
    %v1409 = vpack.c.b16 %v1357, %v1355
    %v1410 = vpack.c.b16 %v1358, %v1356
    %v1411 = vpack.c.b16 %v1361, %v1359
    %v1412 = vpack.c.b16 %v1362, %v1360
    %v1413 = vpack.c.b16 %v1365, %v1363
    %v1414 = vpack.c.b16 %v1366, %v1364
    %v1415 = vpack.c.b16 %v1369, %v1367
    %v1416 = vpack.c.b16 %v1370, %v1368
    %v1417 = vpack.c.b16 %v1373, %v1371
    %v1418 = vpack.c.b16 %v1374, %v1372
    %v1419 = vpack.c.b16 %v1377, %v1375
    %v1420 = vpack.c.b16 %v1378, %v1376
    %v1421 = vpack.c.b16 %v1381, %v1379
    %v1422 = vpack.c.b16 %v1382, %v1380
    %v1423 = vpack.c.b16 %v1385, %v1383
    %v1424 = vpack.c.b16 %v1386, %v1384
    %v1425 = vpack.c.b16 %v1389, %v1387
    %v1426 = vpack.c.b16 %v1390, %v1388
    %v1427 = vpack.c.b16 %v1393, %v1391
    %v1428 = vpack.c.b16 %v1394, %v1392
    %v1429 = vpack.c.b16 %v1397, %v1395
    %v1430 = vpack.c.b16 %v1398, %v1396
    %1463 = vmatprep.subr.bf16.mxu0 %v1400
    %1464 = vmatpush1.bf16.msra.mxu0 %v1399
    %1465 = vmatprep.subr.bf16.mxu0 %v1402
    %1466 = vmatpush1.bf16.msra.mxu0 %v1401
    %1467 = vmatprep.subr.bf16.mxu0 %v1404
    %1468 = vmatpush1.bf16.msra.mxu0 %v1403
    %1469 = vmatprep.subr.bf16.mxu0 %v1406
    %1470 = vmatpush1.bf16.msra.mxu0 %v1405
    %1471 = vmatprep.subr.bf16.mxu0 %v1408
    %1472 = vmatpush1.bf16.msra.mxu0 %v1407
    %1473 = vmatprep.subr.bf16.mxu0 %v1410
    %1474 = vmatpush1.bf16.msra.mxu0 %v1409
    %1475 = vmatprep.subr.bf16.mxu0 %v1412
    %1476 = vmatpush1.bf16.msra.mxu0 %v1411
    %1477 = vmatprep.subr.bf16.mxu0 %v1414
    %1478 = vmatpush1.bf16.msra.mxu0 %v1413
    %1479 = vmatprep.subr.bf16.mxu0 %v1416
    %1480 = vmatpush1.bf16.msra.mxu0 %v1415
    %1481 = vmatprep.subr.bf16.mxu0 %v1418
    %1482 = vmatpush1.bf16.msra.mxu0 %v1417
    %1483 = vmatprep.subr.bf16.mxu0 %v1420
    %1484 = vmatpush1.bf16.msra.mxu0 %v1419
    %1485 = vmatprep.subr.bf16.mxu0 %v1422
    %1486 = vmatpush1.bf16.msra.mxu0 %v1421
    %1487 = vmatprep.subr.bf16.mxu0 %v1424
    %1488 = vmatpush1.bf16.msra.mxu0 %v1423
    %1489 = vmatprep.subr.bf16.mxu0 %v1426
    %1490 = vmatpush1.bf16.msra.mxu0 %v1425
    %1491 = vmatprep.subr.bf16.mxu0 %v1428
    %1492 = vmatpush1.bf16.msra.mxu0 %v1427
    %1493 = vmatprep.subr.bf16.mxu0 %v1430
    %1494 = vmatpush1.bf16.msra.mxu0 %v1429
    %1495 = vmatprep.mubr.bf16.mxu0 %v1294
    %1496 = vmatmul.mubr.bf16.gmra.mrb[0].mxu0 %v1293
    %v1497 = vpop.f32.mrb[0].mxu0
    %v1498 = vadd.f32 %v1301, %v1497
    %v1499 = vpop.f32.mrb[0].mxu0
    %v1500 = vpop.f32.mrb[0].mxu0
    %v1501 = vpop.f32.mrb[0].mxu0
    %1502 = vdwg.mxu0
    %v1503 = vld [vmem:[#allocation7] sm:$0xff]
    %vm1504 = vcmp.eq.s32.totalorder %v1503, 0
    %v1505 = vsel %vm1504, -1e+08, %v1498
    %1506 = vst [vmem:[#allocation13] sm:$0xff] %v1505
    // Predicated region
    $region42: #{tpu_custom_call.1} parent=1 // pred_check
      _
    $region43: #{tpu_custom_call.1} parent=1 // pred_check_branch
      %1508 = sbr.rel (0) target = $region45
    $region44: #{tpu_custom_call.1} parent=1 // pred_region
      %s1510 = ssub.s32 128, 128
      %1511 = vsyncadd [#allocation6], %s1510
      %s1513 = sshll.u32 [#allocation13], 4
      %s1514 = int_to_ptr.vmem [resolvable:$true] %s1513
      %1516 = dma.vmem_to_hbm [thread:$0]  %s1514, 128, %s6, [#allocation6]
    $region45: #{tpu_custom_call.1} parent=1 // pred_fallthru
      _
    // Predicated region
    $region46: #{tpu_custom_call.1} parent=1 // pred_check
      _
    $region47: #{tpu_custom_call.1} parent=1 // pred_check_branch
      %1518 = sbr.rel (0) target = $region49
    $region48: #{tpu_custom_call.1} parent=1 // pred_region
      %1519 = dma.done [#allocation6], 128
    $region49: #{tpu_custom_call.1} parent=1 // pred_fallthru
      _
    %1520 = vsyncpa [#allocation5], 1
    %1521 = vsyncpa [#allocation8], 1
    %1522 = vsyncpa [#allocation11], 1
    %1523 = vsyncpa [#allocation6], 1

</llo_original>
